<compile_context>
chip_gen: v7x
topology: tpu7x:2x2x1
jax: 0.10.0
libtpu: 0.0.40
codegen_flags: <defaults>
</compile_context>

<pallas_src>
import math
import functools

import numpy as np
import jax
import jax.numpy as jnp
from jax.experimental import pallas as pl
from jax.experimental.pallas import tpu as pltpu


# ---------------------------------------------------------------------------
# Kernel bodies
# ---------------------------------------------------------------------------
def _embedding_kernel_mxu(lhs_ref, w_ref, table_ref, out_ref):
    """[TR, K] @ [K, D] on the MXU (full-f32 passes), add the resident
    (pos_emb + b_cov + b_conv) table, single store."""
    acc = jnp.dot(lhs_ref[...], w_ref[...],
                  precision=jax.lax.Precision.HIGHEST,
                  preferred_element_type=jnp.float32)
    out_ref[...] = (acc + table_ref[...]).astype(out_ref.dtype)


def _embedding_kernel_vpu(lhs_ref, w_ref, table_ref, out_ref, *, K):
    """Exact-f32 VPU path: K unrolled broadcast-FMAs into one accumulator.
    Preferred on v5e (kernel is HBM-write-bound there, the MXU buys nothing);
    also the robust fallback if the MXU variant fails to lower."""
    lhs = lhs_ref[...]
    w = w_ref[...]
    acc = table_ref[...].astype(jnp.float32)
    for k in range(K):
        acc = acc + lhs[:, k:k + 1] * w[k:k + 1, :]
    out_ref[...] = acc.astype(out_ref.dtype)


# ---------------------------------------------------------------------------
# VMEM accounting / tiling
# ---------------------------------------------------------------------------
def _round_up(n, m):
    return ((n + m - 1) // m) * m


def _padded_block_bytes(rows, cols, itemsize=4):
    # A VMEM block pads its last dim to 128 lanes and its 2nd-to-last dim to
    # 8 sublanes (f32).
    return _round_up(max(rows, 1), 8) * _round_up(max(cols, 1), 128) * itemsize


def _vmem_limit_bytes():
    """Generation-aware scoped-VMEM limit: 128 MiB parts (v5e/v6e) can take a
    64 MiB scoped limit; v7x only has 64 MiB physical, so stay at 40 MiB."""
    try:
        cap = pltpu.get_tpu_info().vmem_capacity_bytes
    except Exception:
        cap = 64 * 1024 * 1024          # conservative (v7x-sized) default
    if cap >= 96 * 1024 * 1024:
        return 64 * 1024 * 1024
    return 40 * 1024 * 1024


def _pick_row_tile(rows, L, K, D, budget_bytes):
    """Rows of the flattened [B*L] axis processed per grid step."""
    candidates = []
    for tr in range(1, rows + 1):
        if rows % tr:
            continue
        # Positional-table alignment: a block covers whole sequences
        # (tr % L == 0) or an integer fraction of one (L % tr == 0).
        if tr % L and L % tr:
            continue
        # (8,128) rule on the 2nd-to-last block dim.
        if tr % 8 and tr != rows:
            continue
        table_bufs = 1 if tr % L == 0 else 2          # resident vs revisited
        footprint = (2 * _padded_block_bytes(tr, K)   # lhs  (double-buffered)
                     + 2 * _padded_block_bytes(tr, D)  # out  (double-buffered)
                     + 1 * _padded_block_bytes(K, D)   # resident fused weight
                     + table_bufs * _padded_block_bytes(tr, D))
        if footprint > budget_bytes:
            continue
        candidates.append(tr)
    if not candidates:
        return rows
    # Prefer >= 4 grid steps (2 per v7x TensorCore + pipelining) when the
    # problem allows; then tiles of >= 512 rows (HBM roofline ~saturates
    # there); otherwise the largest tile available.
    pool = [t for t in candidates if rows // t >= 4] or candidates
    big = [t for t in pool if t >= 512]
    return min(big) if big else max(pool)


# ---------------------------------------------------------------------------
# Wrapper
# ---------------------------------------------------------------------------
def single_step_embedding(x, w_cov, b_cov, w_conv, b_conv, pos_vec, num_class,
                          *, out_dtype=jnp.float32, use_mxu=True):
    """x: [B, L, F] float32 with columns [data, cov_1..cov_C, seq_id].
    Returns [B, L, D] (out_dtype; keep float32 to match the PyTorch module,
    bf16 is a worthwhile option on write-bound v5e)."""
    B, L, F = x.shape
    Cp1, D = w_cov.shape
    C = Cp1 - 1
    K = C + 4                      # prev, data, next, cov_1..cov_C, seq_id

    x = x.astype(jnp.float32)

    # ---- host-side packing: dense LHS, fused weight, resident table -------
    data = x[:, :, 0]
    prev = jnp.roll(data, 1, axis=1)           # circular x[t-1]
    nxt = jnp.roll(data, -1, axis=1)           # circular x[t+1]
    seq = x[:, :, F - 1] / float(num_class) - 0.5
    lhs = jnp.concatenate(
        [prev[..., None], data[..., None], nxt[..., None],
         x[:, :, 1:1 + C], seq[..., None]], axis=-1).reshape(B * L, K)

    taps = w_conv.reshape(D, 3)                # Conv1d weight [D, 1, 3]
    w_full = jnp.concatenate(
        [taps[:, 0][None, :], taps[:, 1][None, :], taps[:, 2][None, :],
         w_cov], axis=0).astype(jnp.float32)   # [K, D]

    # Sinusoidal positional table with both biases folded in, computed once.
    pos = jnp.arange(L, dtype=jnp.float32)[:, None]
    angles = pos / pos_vec[None, :]
    d_idx = jnp.arange(D)[None, :]
    pos_emb = jnp.where(d_idx % 2 == 0, jnp.sin(angles), jnp.cos(angles))
    table = (pos_emb + b_cov[None, :] + b_conv[None, :]).astype(jnp.float32)

    # ---- tiling ------------------------------------------------------------
    rows = B * L
    limit = _vmem_limit_bytes()
    tr = _pick_row_tile(rows, L, K, D, budget_bytes=(limit * 3) // 4)

    if tr % L == 0:
        # Block covers whole sequences: tile the table host-side so its block
        # index is constant (fully resident, single buffer).
        table_arr = jnp.tile(table, (tr // L, 1)) if tr > L else table  # [tr,D]
    else:
        table_arr = table                                               # [L, D]
    n_table_blocks = table_arr.shape[0] // tr

    def build(kernel_body, buffer_residents):
        res_kw = {"pipeline_mode": pl.Buffered(1)} if buffer_residents else {}
        w_spec = pl.BlockSpec((K, D), lambda i: (0, 0), **res_kw)
        if n_table_blocks == 1:
            table_spec = pl.BlockSpec((tr, D), lambda i: (0, 0), **res_kw)
        else:
            table_spec = pl.BlockSpec((tr, D),
                                      lambda i: (i % n_table_blocks, 0))
        return pl.pallas_call(
            kernel_body,
            out_shape=jax.ShapeDtypeStruct((rows, D), out_dtype),
            grid_spec=pltpu.PrefetchScalarGridSpec(
                num_scalar_prefetch=0,
                grid=(rows // tr,),
                in_specs=[pl.BlockSpec((tr, K), lambda i: (i, 0)),
                          w_spec,
                          table_spec],
                out_specs=pl.BlockSpec((tr, D), lambda i: (i, 0)),
            ),
            compiler_params=pltpu.CompilerParams(
                dimension_semantics=("parallel",),
                vmem_limit_bytes=limit),
        )

    vpu_body = functools.partial(_embedding_kernel_vpu, K=K)
    variants = []
    if use_mxu:
        variants += [(_embedding_kernel_mxu, True),
                     (_embedding_kernel_mxu, False)]
    variants += [(vpu_body, True), (vpu_body, False)]

    # Graceful degradation: if pl.Buffered(1) or HIGHEST-precision matmul is
    # not supported by this jax/libtpu combination, fall back to the exact
    # VPU kernel with default buffering (previously validated configuration).
    last_err = None
    for body, buffered in variants:
        try:
            out = build(body, buffered)(lhs, w_full, table_arr)
            return out.reshape(B, L, D)
        except Exception as err:
            last_err = err
    raise last_err


# ---------------------------------------------------------------------------
# Pure-JAX reference (mirror of the PyTorch forward) for validation
# ---------------------------------------------------------------------------
def reference(x, w_cov, b_cov, w_conv, b_conv, pos_vec, num_class):
    B, L, F = x.shape
    Cp1, D = w_cov.shape
    C = Cp1 - 1
    covs = x[:, :, 1:1 + C]
    seq_ids = (x[:, :, -1] / num_class - 0.5)[..., None]
    covs = jnp.concatenate([covs, seq_ids], axis=-1)
    cov_emb = jnp.einsum('blc,cd->bld', covs, w_cov,
                         precision=jax.lax.Precision.HIGHEST) + b_cov
    data = x[:, :, 0]
    prev = jnp.roll(data, 1, axis=1)
    nxt = jnp.roll(data, -1, axis=1)
    wk = w_conv.reshape(D, 3)
    data_emb = (prev[..., None] * wk[:, 0] + data[..., None] * wk[:, 1]
                + nxt[..., None] * wk[:, 2] + b_conv)
    pos = jnp.arange(L, dtype=jnp.float32)[None, :, None]
    angles = pos / pos_vec
    d_idx = jnp.arange(D)
    pos_emb = jnp.where(d_idx % 2 == 0, jnp.sin(angles), jnp.cos(angles))
    return cov_emb + data_emb + pos_emb


if __name__ == "__main__":
    # Module config (small, consistent with the forward pass):
    B, L = 2, 16                 # batch, sequence length (= input_size)
    cov_size = 4
    num_seq = 8                  # num_class
    d_model = 32
    F = cov_size + 2             # [data, cov_1..cov_4, seq_id]

    key = jax.random.PRNGKey(0)
    kx, kw_lin, kw_conv, kb_conv = jax.random.split(key, 4)

    # Input
    x = jax.random.normal(kx, (B, L, F), dtype=jnp.float32)
    # make the last column look like sequence ids in [0, num_seq)
    seq_col = jnp.mod(jnp.floor(jnp.abs(x[:, :, -1]) * 10.0), num_seq)
    x = x.at[:, :, -1].set(seq_col)

    # Parameters (deterministic init mirroring the module's __init__ shapes)
    # Linear(cov_size+1, d_model): xavier normal weight, zero bias.
    fan_in_lin, fan_out_lin = cov_size + 1, d_model
    xavier_std = math.sqrt(2.0 / (fan_in_lin + fan_out_lin))
    w_cov = xavier_std * jax.random.normal(
        kw_lin, (cov_size + 1, d_model), dtype=jnp.float32)
    b_cov = jnp.zeros((d_model,), dtype=jnp.float32)

    # Conv1d(1, d_model, k=3): kaiming normal (fan_in, leaky_relu) weight.
    fan_in_conv = 1 * 3
    gain = math.sqrt(2.0 / (1.0 + 0.01 ** 2))
    kaiming_std = gain / math.sqrt(fan_in_conv)
    w_conv = kaiming_std * jax.random.normal(
        kw_conv, (d_model, 1, 3), dtype=jnp.float32)
    bound = 1.0 / math.sqrt(fan_in_conv)
    b_conv = jax.random.uniform(kb_conv, (d_model,), dtype=jnp.float32,
                                minval=-bound, maxval=bound)

    # position_vec: 10000^(2*(i//2)/d_model)
    pos_vec = jnp.asarray(
        [math.pow(10000.0, 2.0 * (i // 2) / d_model) for i in range(d_model)],
        dtype=jnp.float32)

    out = single_step_embedding(x, w_cov, b_cov, w_conv, b_conv, pos_vec,
                                num_seq)
    out = jax.block_until_ready(out)

    ref = reference(x, w_cov, b_cov, w_conv, b_conv, pos_vec, num_seq)
    np.testing.assert_allclose(np.asarray(out), np.asarray(ref),
                               rtol=1e-4, atol=1e-4)

    print("KERNEL_OK")
</pallas_src>

<mosaic_0001>
module attributes {stable_mosaic.version = 11 : i64} {
  func.func @_embedding_kernel_mxu(%arg0: i32, %arg1: memref<8x8xf32, #tpu.memory_space<vmem>>, %arg2: memref<8x32xf32, #tpu.memory_space<vmem>>, %arg3: memref<8x32xf32, #tpu.memory_space<vmem>>, %arg4: memref<8x32xf32, #tpu.memory_space<vmem>>) attributes {dimension_semantics = [#tpu.dimension_semantics<parallel>], iteration_bounds = array<i64: 4>, scalar_prefetch = 0 : i64, scratch_operands = 0 : i64, tpu.core_type = #tpu.core_type<tc>, window_params = [{transform_indices = @transform_0, window_bounds = array<i64: 8, 8>}, {pipeline_mode = #tpu.pipeline_mode<synchronous>, transform_indices = @transform_1, window_bounds = array<i64: 8, 32>}, {transform_indices = @transform_2, window_bounds = array<i64: 8, 32>}, {transform_indices = @transform_3, window_bounds = array<i64: 8, 32>}]} {
    %c0 = arith.constant 0 : index
    %c0_0 = arith.constant 0 : index
    %0 = vector.load %arg1[%c0, %c0_0] : memref<8x8xf32, #tpu.memory_space<vmem>>, vector<8x8xf32>
    %c0_1 = arith.constant 0 : index
    %c0_2 = arith.constant 0 : index
    %1 = vector.load %arg2[%c0_1, %c0_2] : memref<8x32xf32, #tpu.memory_space<vmem>>, vector<8x32xf32>
    %cst = arith.constant dense<0.000000e+00> : vector<8x32xf32>
    %2 = tpu.matmul %0, %1, %cst {dimension_numbers = #tpu.dot_dimension_numbers<[1], [0], [0], [1], [0, 0, 1, 1], [], []>, precision = #tpu.contract_precision<fp32>} : vector<8x8xf32>, vector<8x32xf32>, vector<8x32xf32> -> vector<8x32xf32>
    %c0_3 = arith.constant 0 : index
    %c0_4 = arith.constant 0 : index
    %3 = vector.load %arg3[%c0_3, %c0_4] : memref<8x32xf32, #tpu.memory_space<vmem>>, vector<8x32xf32>
    %4 = arith.addf %2, %3 : vector<8x32xf32>
    %c0_5 = arith.constant 0 : index
    %c0_6 = arith.constant 0 : index
    %5 = vector.load %arg4[%c0_5, %c0_6] : memref<8x32xf32, #tpu.memory_space<vmem>>, vector<8x32xf32>
    tpu.vector_store %arg4[%c0_5, %c0_6], %4 {strides = array<i32>} : memref<8x32xf32, #tpu.memory_space<vmem>>, vector<8x32xf32>,
    return
  }
  func.func @transform_0(%arg0: i32) -> (i32, i32) {
    %c0_i32 = arith.constant 0 : i32
    %c0_i32_0 = arith.constant 0 : i32
    return %arg0, %c0_i32 : i32, i32
  }
  func.func @transform_1(%arg0: i32) -> (i32, i32) {
    %c0_i32 = arith.constant 0 : i32
    %c0_i32_0 = arith.constant 0 : i32
    %c0_i32_1 = arith.constant 0 : i32
    return %c0_i32, %c0_i32_0 : i32, i32
  }
  func.func @transform_2(%arg0: i32) -> (i32, i32) {
    %c2_i32 = arith.constant 2 : i32
    %c0_i32 = arith.constant 0 : i32
    %0 = arith.cmpi eq, %c2_i32, %c0_i32 : i32
    %c1_i32 = arith.constant 1 : i32
    %1 = arith.select %0, %c1_i32, %c2_i32 : i32
    %2 = arith.remsi %arg0, %1 : i32
    %c0_i32_0 = arith.constant 0 : i32
    %3 = arith.cmpi ne, %2, %c0_i32_0 : i32
    %c0_i32_1 = arith.constant 0 : i32
    %4 = arith.cmpi slt, %2, %c0_i32_1 : i32
    %c0_i32_2 = arith.constant 0 : i32
    %5 = arith.cmpi slt, %1, %c0_i32_2 : i32
    %6 = arith.xori %4, %5 : i1
    %7 = arith.andi %6, %3 : i1
    %8 = arith.addi %2, %1 : i32
    %9 = arith.select %7, %8, %2 : i32
    %c0_i32_3 = arith.constant 0 : i32
    %c0_i32_4 = arith.constant 0 : i32
    return %9, %c0_i32_3 : i32, i32
  }
  func.func @transform_3(%arg0: i32) -> (i32, i32) {
    %c0_i32 = arith.constant 0 : i32
    %c0_i32_0 = arith.constant 0 : i32
    return %arg0, %c0_i32 : i32, i32
  }
}

module attributes {stable_mosaic.version = 11 : i64} {
  func.func @_embedding_kernel_mxu(%arg0: i32, %arg1: memref<8x8xf32, #tpu.memory_space<vmem>>, %arg2: memref<8x32xf32, #tpu.memory_space<vmem>>, %arg3: memref<8x32xf32, #tpu.memory_space<vmem>>, %arg4: memref<8x32xf32, #tpu.memory_space<vmem>>) attributes {dimension_semantics = [#tpu.dimension_semantics<parallel>], iteration_bounds = array<i64: 4>, scalar_prefetch = 0 : i64, scratch_operands = 0 : i64, tpu.core_type = #tpu.core_type<tc>, window_params = [{transform_indices = @transform_0, window_bounds = array<i64: 8, 8>}, {pipeline_mode = #tpu.pipeline_mode<synchronous>, transform_indices = @transform_1, window_bounds = array<i64: 8, 32>}, {transform_indices = @transform_2, window_bounds = array<i64: 8, 32>}, {transform_indices = @transform_3, window_bounds = array<i64: 8, 32>}]} {
    %c0 = arith.constant 0 : index
    %c0_0 = arith.constant 0 : index
    %0 = vector.load %arg1[%c0, %c0_0] : memref<8x8xf32, #tpu.memory_space<vmem>>, vector<8x8xf32>
    %c0_1 = arith.constant 0 : index
    %c0_2 = arith.constant 0 : index
    %1 = vector.load %arg2[%c0_1, %c0_2] : memref<8x32xf32, #tpu.memory_space<vmem>>, vector<8x32xf32>
    %cst = arith.constant dense<0.000000e+00> : vector<8x32xf32>
    %2 = tpu.matmul %0, %1, %cst {dimension_numbers = #tpu.dot_dimension_numbers<[1], [0], [0], [1], [0, 0, 1, 1], [], []>, precision = #tpu.contract_precision<fp32>} : vector<8x8xf32>, vector<8x32xf32>, vector<8x32xf32> -> vector<8x32xf32>
    %c0_3 = arith.constant 0 : index
    %c0_4 = arith.constant 0 : index
    %3 = vector.load %arg3[%c0_3, %c0_4] : memref<8x32xf32, #tpu.memory_space<vmem>>, vector<8x32xf32>
    %4 = arith.addf %2, %3 : vector<8x32xf32>
    %c0_5 = arith.constant 0 : index
    %c0_6 = arith.constant 0 : index
    %5 = vector.load %arg4[%c0_5, %c0_6] : memref<8x32xf32, #tpu.memory_space<vmem>>, vector<8x32xf32>
    tpu.vector_store %arg4[%c0_5, %c0_6], %4 {strides = array<i32>} : memref<8x32xf32, #tpu.memory_space<vmem>>, vector<8x32xf32>,
    return
  }
  func.func @transform_0(%arg0: i32) -> (i32, i32) {
    %c0_i32 = arith.constant 0 : i32
    %c0_i32_0 = arith.constant 0 : i32
    return %arg0, %c0_i32 : i32, i32
  }
  func.func @transform_1(%arg0: i32) -> (i32, i32) {
    %c0_i32 = arith.constant 0 : i32
    %c0_i32_0 = arith.constant 0 : i32
    %c0_i32_1 = arith.constant 0 : i32
    return %c0_i32, %c0_i32_0 : i32, i32
  }
  func.func @transform_2(%arg0: i32) -> (i32, i32) {
    %c2_i32 = arith.constant 2 : i32
    %c0_i32 = arith.constant 0 : i32
    %0 = arith.cmpi eq, %c2_i32, %c0_i32 : i32
    %c1_i32 = arith.constant 1 : i32
    %1 = arith.select %0, %c1_i32, %c2_i32 : i32
    %2 = arith.remsi %arg0, %1 : i32
    %c0_i32_0 = arith.constant 0 : i32
    %3 = arith.cmpi ne, %2, %c0_i32_0 : i32
    %c0_i32_1 = arith.constant 0 : i32
    %4 = arith.cmpi slt, %2, %c0_i32_1 : i32
    %c0_i32_2 = arith.constant 0 : i32
    %5 = arith.cmpi slt, %1, %c0_i32_2 : i32
    %6 = arith.xori %4, %5 : i1
    %7 = arith.andi %6, %3 : i1
    %8 = arith.addi %2, %1 : i32
    %9 = arith.select %7, %8, %2 : i32
    %c0_i32_3 = arith.constant 0 : i32
    %c0_i32_4 = arith.constant 0 : i32
    return %9, %c0_i32_3 : i32, i32
  }
  func.func @transform_3(%arg0: i32) -> (i32, i32) {
    %c0_i32 = arith.constant 0 : i32
    %c0_i32_0 = arith.constant 0 : i32
    return %arg0, %c0_i32 : i32, i32
  }
}

module attributes {stable_mosaic.version = 11 : i64} {
  func.func @_embedding_kernel_vpu(%arg0: i32, %arg1: memref<8x8xf32, #tpu.memory_space<vmem>>, %arg2: memref<8x32xf32, #tpu.memory_space<vmem>>, %arg3: memref<8x32xf32, #tpu.memory_space<vmem>>, %arg4: memref<8x32xf32, #tpu.memory_space<vmem>>) attributes {dimension_semantics = [#tpu.dimension_semantics<parallel>], iteration_bounds = array<i64: 4>, scalar_prefetch = 0 : i64, scratch_operands = 0 : i64, tpu.core_type = #tpu.core_type<tc>, window_params = [{transform_indices = @transform_0, window_bounds = array<i64: 8, 8>}, {pipeline_mode = #tpu.pipeline_mode<synchronous>, transform_indices = @transform_1, window_bounds = array<i64: 8, 32>}, {transform_indices = @transform_2, window_bounds = array<i64: 8, 32>}, {transform_indices = @transform_3, window_bounds = array<i64: 8, 32>}]} {
    %c0 = arith.constant 0 : index
    %c0_0 = arith.constant 0 : index
    %0 = vector.load %arg1[%c0, %c0_0] : memref<8x8xf32, #tpu.memory_space<vmem>>, vector<8x8xf32>
    %c0_1 = arith.constant 0 : index
    %c0_2 = arith.constant 0 : index
    %1 = vector.load %arg2[%c0_1, %c0_2] : memref<8x32xf32, #tpu.memory_space<vmem>>, vector<8x32xf32>
    %c0_3 = arith.constant 0 : index
    %c0_4 = arith.constant 0 : index
    %2 = vector.load %arg3[%c0_3, %c0_4] : memref<8x32xf32, #tpu.memory_space<vmem>>, vector<8x32xf32>
    %3 = vector.extract_strided_slice %0 {offsets = [0, 0], sizes = [8, 1], strides = [1, 1]} : vector<8x8xf32> to vector<8x1xf32>
    %4 = vector.extract_strided_slice %1 {offsets = [0, 0], sizes = [1, 32], strides = [1, 1]} : vector<8x32xf32> to vector<1x32xf32>
    %5 = vector.broadcast %3 : vector<8x1xf32> to vector<8x32xf32>
    %6 = vector.broadcast %4 : vector<1x32xf32> to vector<8x32xf32>
    %7 = arith.mulf %5, %6 : vector<8x32xf32>
    %8 = arith.addf %2, %7 : vector<8x32xf32>
    %9 = vector.extract_strided_slice %0 {offsets = [0, 1], sizes = [8, 1], strides = [1, 1]} : vector<8x8xf32> to vector<8x1xf32>
    %10 = vector.extract_strided_slice %1 {offsets = [1, 0], sizes = [1, 32], strides = [1, 1]} : vector<8x32xf32> to vector<1x32xf32>
    %11 = vector.broadcast %9 : vector<8x1xf32> to vector<8x32xf32>
    %12 = vector.broadcast %10 : vector<1x32xf32> to vector<8x32xf32>
    %13 = arith.mulf %11, %12 : vector<8x32xf32>
    %14 = arith.addf %8, %13 : vector<8x32xf32>
    %15 = vector.extract_strided_slice %0 {offsets = [0, 2], sizes = [8, 1], strides = [1, 1]} : vector<8x8xf32> to vector<8x1xf32>
    %16 = vector.extract_strided_slice %1 {offsets = [2, 0], sizes = [1, 32], strides = [1, 1]} : vector<8x32xf32> to vector<1x32xf32>
    %17 = vector.broadcast %15 : vector<8x1xf32> to vector<8x32xf32>
    %18 = vector.broadcast %16 : vector<1x32xf32> to vector<8x32xf32>
    %19 = arith.mulf %17, %18 : vector<8x32xf32>
    %20 = arith.addf %14, %19 : vector<8x32xf32>
    %21 = vector.extract_strided_slice %0 {offsets = [0, 3], sizes = [8, 1], strides = [1, 1]} : vector<8x8xf32> to vector<8x1xf32>
    %22 = vector.extract_strided_slice %1 {offsets = [3, 0], sizes = [1, 32], strides = [1, 1]} : vector<8x32xf32> to vector<1x32xf32>
    %23 = vector.broadcast %21 : vector<8x1xf32> to vector<8x32xf32>
    %24 = vector.broadcast %22 : vector<1x32xf32> to vector<8x32xf32>
    %25 = arith.mulf %23, %24 : vector<8x32xf32>
    %26 = arith.addf %20, %25 : vector<8x32xf32>
    %27 = vector.extract_strided_slice %0 {offsets = [0, 4], sizes = [8, 1], strides = [1, 1]} : vector<8x8xf32> to vector<8x1xf32>
    %28 = vector.extract_strided_slice %1 {offsets = [4, 0], sizes = [1, 32], strides = [1, 1]} : vector<8x32xf32> to vector<1x32xf32>
    %29 = vector.broadcast %27 : vector<8x1xf32> to vector<8x32xf32>
    %30 = vector.broadcast %28 : vector<1x32xf32> to vector<8x32xf32>
    %31 = arith.mulf %29, %30 : vector<8x32xf32>
    %32 = arith.addf %26, %31 : vector<8x32xf32>
    %33 = vector.extract_strided_slice %0 {offsets = [0, 5], sizes = [8, 1], strides = [1, 1]} : vector<8x8xf32> to vector<8x1xf32>
    %34 = vector.extract_strided_slice %1 {offsets = [5, 0], sizes = [1, 32], strides = [1, 1]} : vector<8x32xf32> to vector<1x32xf32>
    %35 = vector.broadcast %33 : vector<8x1xf32> to vector<8x32xf32>
    %36 = vector.broadcast %34 : vector<1x32xf32> to vector<8x32xf32>
    %37 = arith.mulf %35, %36 : vector<8x32xf32>
    %38 = arith.addf %32, %37 : vector<8x32xf32>
    %39 = vector.extract_strided_slice %0 {offsets = [0, 6], sizes = [8, 1], strides = [1, 1]} : vector<8x8xf32> to vector<8x1xf32>
    %40 = vector.extract_strided_slice %1 {offsets = [6, 0], sizes = [1, 32], strides = [1, 1]} : vector<8x32xf32> to vector<1x32xf32>
    %41 = vector.broadcast %39 : vector<8x1xf32> to vector<8x32xf32>
    %42 = vector.broadcast %40 : vector<1x32xf32> to vector<8x32xf32>
    %43 = arith.mulf %41, %42 : vector<8x32xf32>
    %44 = arith.addf %38, %43 : vector<8x32xf32>
    %45 = vector.extract_strided_slice %0 {offsets = [0, 7], sizes = [8, 1], strides = [1, 1]} : vector<8x8xf32> to vector<8x1xf32>
    %46 = vector.extract_strided_slice %1 {offsets = [7, 0], sizes = [1, 32], strides = [1, 1]} : vector<8x32xf32> to vector<1x32xf32>
    %47 = vector.broadcast %45 : vector<8x1xf32> to vector<8x32xf32>
    %48 = vector.broadcast %46 : vector<1x32xf32> to vector<8x32xf32>
    %49 = arith.mulf %47, %48 : vector<8x32xf32>
    %50 = arith.addf %44, %49 : vector<8x32xf32>
    %c0_5 = arith.constant 0 : index
    %c0_6 = arith.constant 0 : index
    %51 = vector.load %arg4[%c0_5, %c0_6] : memref<8x32xf32, #tpu.memory_space<vmem>>, vector<8x32xf32>
    tpu.vector_store %arg4[%c0_5, %c0_6], %50 {strides = array<i32>} : memref<8x32xf32, #tpu.memory_space<vmem>>, vector<8x32xf32>,
    return
  }
  func.func @transform_0(%arg0: i32) -> (i32, i32) {
    %c0_i32 = arith.constant 0 : i32
    %c0_i32_0 = arith.constant 0 : i32
    return %arg0, %c0_i32 : i32, i32
  }
  func.func @transform_1(%arg0: i32) -> (i32, i32) {
    %c0_i32 = arith.constant 0 : i32
    %c0_i32_0 = arith.constant 0 : i32
    %c0_i32_1 = arith.constant 0 : i32
    return %c0_i32, %c0_i32_0 : i32, i32
  }
  func.func @transform_2(%arg0: i32) -> (i32, i32) {
    %c2_i32 = arith.constant 2 : i32
    %c0_i32 = arith.constant 0 : i32
    %0 = arith.cmpi eq, %c2_i32, %c0_i32 : i32
    %c1_i32 = arith.constant 1 : i32
    %1 = arith.select %0, %c1_i32, %c2_i32 : i32
    %2 = arith.remsi %arg0, %1 : i32
    %c0_i32_0 = arith.constant 0 : i32
    %3 = arith.cmpi ne, %2, %c0_i32_0 : i32
    %c0_i32_1 = arith.constant 0 : i32
    %4 = arith.cmpi slt, %2, %c0_i32_1 : i32
    %c0_i32_2 = arith.constant 0 : i32
    %5 = arith.cmpi slt, %1, %c0_i32_2 : i32
    %6 = arith.xori %4, %5 : i1
    %7 = arith.andi %6, %3 : i1
    %8 = arith.addi %2, %1 : i32
    %9 = arith.select %7, %8, %2 : i32
    %c0_i32_3 = arith.constant 0 : i32
    %c0_i32_4 = arith.constant 0 : i32
    return %9, %c0_i32_3 : i32, i32
  }
  func.func @transform_3(%arg0: i32) -> (i32, i32) {
    %c0_i32 = arith.constant 0 : i32
    %c0_i32_0 = arith.constant 0 : i32
    return %arg0, %c0_i32 : i32, i32
  }
}

module attributes {stable_mosaic.version = 11 : i64} {
  func.func @_embedding_kernel_vpu(%arg0: i32, %arg1: memref<8x8xf32, #tpu.memory_space<vmem>>, %arg2: memref<8x32xf32, #tpu.memory_space<vmem>>, %arg3: memref<8x32xf32, #tpu.memory_space<vmem>>, %arg4: memref<8x32xf32, #tpu.memory_space<vmem>>) attributes {dimension_semantics = [#tpu.dimension_semantics<parallel>], iteration_bounds = array<i64: 4>, scalar_prefetch = 0 : i64, scratch_operands = 0 : i64, tpu.core_type = #tpu.core_type<tc>, window_params = [{transform_indices = @transform_0, window_bounds = array<i64: 8, 8>}, {pipeline_mode = #tpu.pipeline_mode<synchronous>, transform_indices = @transform_1, window_bounds = array<i64: 8, 32>}, {transform_indices = @transform_2, window_bounds = array<i64: 8, 32>}, {transform_indices = @transform_3, window_bounds = array<i64: 8, 32>}]} {
    %c0 = arith.constant 0 : index
    %c0_0 = arith.constant 0 : index
    %0 = vector.load %arg1[%c0, %c0_0] : memref<8x8xf32, #tpu.memory_space<vmem>>, vector<8x8xf32>
    %c0_1 = arith.constant 0 : index
    %c0_2 = arith.constant 0 : index
    %1 = vector.load %arg2[%c0_1, %c0_2] : memref<8x32xf32, #tpu.memory_space<vmem>>, vector<8x32xf32>
    %c0_3 = arith.constant 0 : index
    %c0_4 = arith.constant 0 : index
    %2 = vector.load %arg3[%c0_3, %c0_4] : memref<8x32xf32, #tpu.memory_space<vmem>>, vector<8x32xf32>
    %3 = vector.extract_strided_slice %0 {offsets = [0, 0], sizes = [8, 1], strides = [1, 1]} : vector<8x8xf32> to vector<8x1xf32>
    %4 = vector.extract_strided_slice %1 {offsets = [0, 0], sizes = [1, 32], strides = [1, 1]} : vector<8x32xf32> to vector<1x32xf32>
    %5 = vector.broadcast %3 : vector<8x1xf32> to vector<8x32xf32>
    %6 = vector.broadcast %4 : vector<1x32xf32> to vector<8x32xf32>
    %7 = arith.mulf %5, %6 : vector<8x32xf32>
    %8 = arith.addf %2, %7 : vector<8x32xf32>
    %9 = vector.extract_strided_slice %0 {offsets = [0, 1], sizes = [8, 1], strides = [1, 1]} : vector<8x8xf32> to vector<8x1xf32>
    %10 = vector.extract_strided_slice %1 {offsets = [1, 0], sizes = [1, 32], strides = [1, 1]} : vector<8x32xf32> to vector<1x32xf32>
    %11 = vector.broadcast %9 : vector<8x1xf32> to vector<8x32xf32>
    %12 = vector.broadcast %10 : vector<1x32xf32> to vector<8x32xf32>
    %13 = arith.mulf %11, %12 : vector<8x32xf32>
    %14 = arith.addf %8, %13 : vector<8x32xf32>
    %15 = vector.extract_strided_slice %0 {offsets = [0, 2], sizes = [8, 1], strides = [1, 1]} : vector<8x8xf32> to vector<8x1xf32>
    %16 = vector.extract_strided_slice %1 {offsets = [2, 0], sizes = [1, 32], strides = [1, 1]} : vector<8x32xf32> to vector<1x32xf32>
    %17 = vector.broadcast %15 : vector<8x1xf32> to vector<8x32xf32>
    %18 = vector.broadcast %16 : vector<1x32xf32> to vector<8x32xf32>
    %19 = arith.mulf %17, %18 : vector<8x32xf32>
    %20 = arith.addf %14, %19 : vector<8x32xf32>
    %21 = vector.extract_strided_slice %0 {offsets = [0, 3], sizes = [8, 1], strides = [1, 1]} : vector<8x8xf32> to vector<8x1xf32>
    %22 = vector.extract_strided_slice %1 {offsets = [3, 0], sizes = [1, 32], strides = [1, 1]} : vector<8x32xf32> to vector<1x32xf32>
    %23 = vector.broadcast %21 : vector<8x1xf32> to vector<8x32xf32>
    %24 = vector.broadcast %22 : vector<1x32xf32> to vector<8x32xf32>
    %25 = arith.mulf %23, %24 : vector<8x32xf32>
    %26 = arith.addf %20, %25 : vector<8x32xf32>
    %27 = vector.extract_strided_slice %0 {offsets = [0, 4], sizes = [8, 1], strides = [1, 1]} : vector<8x8xf32> to vector<8x1xf32>
    %28 = vector.extract_strided_slice %1 {offsets = [4, 0], sizes = [1, 32], strides = [1, 1]} : vector<8x32xf32> to vector<1x32xf32>
    %29 = vector.broadcast %27 : vector<8x1xf32> to vector<8x32xf32>
    %30 = vector.broadcast %28 : vector<1x32xf32> to vector<8x32xf32>
    %31 = arith.mulf %29, %30 : vector<8x32xf32>
    %32 = arith.addf %26, %31 : vector<8x32xf32>
    %33 = vector.extract_strided_slice %0 {offsets = [0, 5], sizes = [8, 1], strides = [1, 1]} : vector<8x8xf32> to vector<8x1xf32>
    %34 = vector.extract_strided_slice %1 {offsets = [5, 0], sizes = [1, 32], strides = [1, 1]} : vector<8x32xf32> to vector<1x32xf32>
    %35 = vector.broadcast %33 : vector<8x1xf32> to vector<8x32xf32>
    %36 = vector.broadcast %34 : vector<1x32xf32> to vector<8x32xf32>
    %37 = arith.mulf %35, %36 : vector<8x32xf32>
    %38 = arith.addf %32, %37 : vector<8x32xf32>
    %39 = vector.extract_strided_slice %0 {offsets = [0, 6], sizes = [8, 1], strides = [1, 1]} : vector<8x8xf32> to vector<8x1xf32>
    %40 = vector.extract_strided_slice %1 {offsets = [6, 0], sizes = [1, 32], strides = [1, 1]} : vector<8x32xf32> to vector<1x32xf32>
    %41 = vector.broadcast %39 : vector<8x1xf32> to vector<8x32xf32>
    %42 = vector.broadcast %40 : vector<1x32xf32> to vector<8x32xf32>
    %43 = arith.mulf %41, %42 : vector<8x32xf32>
    %44 = arith.addf %38, %43 : vector<8x32xf32>
    %45 = vector.extract_strided_slice %0 {offsets = [0, 7], sizes = [8, 1], strides = [1, 1]} : vector<8x8xf32> to vector<8x1xf32>
    %46 = vector.extract_strided_slice %1 {offsets = [7, 0], sizes = [1, 32], strides = [1, 1]} : vector<8x32xf32> to vector<1x32xf32>
    %47 = vector.broadcast %45 : vector<8x1xf32> to vector<8x32xf32>
    %48 = vector.broadcast %46 : vector<1x32xf32> to vector<8x32xf32>
    %49 = arith.mulf %47, %48 : vector<8x32xf32>
    %50 = arith.addf %44, %49 : vector<8x32xf32>
    %c0_5 = arith.constant 0 : index
    %c0_6 = arith.constant 0 : index
    %51 = vector.load %arg4[%c0_5, %c0_6] : memref<8x32xf32, #tpu.memory_space<vmem>>, vector<8x32xf32>
    tpu.vector_store %arg4[%c0_5, %c0_6], %50 {strides = array<i32>} : memref<8x32xf32, #tpu.memory_space<vmem>>, vector<8x32xf32>,
    return
  }
  func.func @transform_0(%arg0: i32) -> (i32, i32) {
    %c0_i32 = arith.constant 0 : i32
    %c0_i32_0 = arith.constant 0 : i32
    return %arg0, %c0_i32 : i32, i32
  }
  func.func @transform_1(%arg0: i32) -> (i32, i32) {
    %c0_i32 = arith.constant 0 : i32
    %c0_i32_0 = arith.constant 0 : i32
    %c0_i32_1 = arith.constant 0 : i32
    return %c0_i32, %c0_i32_0 : i32, i32
  }
  func.func @transform_2(%arg0: i32) -> (i32, i32) {
    %c2_i32 = arith.constant 2 : i32
    %c0_i32 = arith.constant 0 : i32
    %0 = arith.cmpi eq, %c2_i32, %c0_i32 : i32
    %c1_i32 = arith.constant 1 : i32
    %1 = arith.select %0, %c1_i32, %c2_i32 : i32
    %2 = arith.remsi %arg0, %1 : i32
    %c0_i32_0 = arith.constant 0 : i32
    %3 = arith.cmpi ne, %2, %c0_i32_0 : i32
    %c0_i32_1 = arith.constant 0 : i32
    %4 = arith.cmpi slt, %2, %c0_i32_1 : i32
    %c0_i32_2 = arith.constant 0 : i32
    %5 = arith.cmpi slt, %1, %c0_i32_2 : i32
    %6 = arith.xori %4, %5 : i1
    %7 = arith.andi %6, %3 : i1
    %8 = arith.addi %2, %1 : i32
    %9 = arith.select %7, %8, %2 : i32
    %c0_i32_3 = arith.constant 0 : i32
    %c0_i32_4 = arith.constant 0 : i32
    return %9, %c0_i32_3 : i32, i32
  }
  func.func @transform_3(%arg0: i32) -> (i32, i32) {
    %c0_i32 = arith.constant 0 : i32
    %c0_i32_0 = arith.constant 0 : i32
    return %arg0, %c0_i32 : i32, i32
  }
}

</mosaic_0001>

<llo_original>
// kernel: tpu_custom_call.1
$region0: #{tpu_custom_call.1}
  #allocation0 [shape = 'u32[]', space=smem, size = 0x4, offset = 0x4, fixed_abs, tag = 'smem constant byte address 0x4 - core index']
  #allocation1 [shape = 'u32[144,128]{1,0:T(1,128)}', space=vmem, size = 0x12000, scoped, tag = 'internal scratch']
  %s0 = inlined_call_operand.vmem [shape: f32[32,8], index: 0, kind: input, shape index: {}]
  %s1 = inlined_call_operand.vmem [shape: f32[8,32], index: 1, kind: input, shape index: {}]
  %s2 = inlined_call_operand.vmem [shape: f32[16,32], index: 2, kind: input, shape index: {}]
  %s3 = inlined_call_operand.hbm [shape: f32[32,32], index: 3, kind: output, shape index: {}]
  %s4 = sld [smem:[#allocation0]]
  $region45: #{tpu_custom_call.1} parent=0
    _
  %s6 = ssub.s32 1, %s4
  %s7 = scalar_select 0, %s6, %s4
  $region1: #{tpu_custom_call.1} parent=0
    #allocation2 [shape = 'u8[8192]{0}', space=vmem, size = 0x2000, scoped, tag = 'output window, operand 0']
    #allocation3 [shape = 's32[2]{0}', space=sflag, size = 0x8, scoped, tag = 'scoped memory for tpu_custom_call.1']
    %8 = vsyncpa [#allocation3], 0
    %s9 = scalar_lea.sflag [#allocation3], 1
    %10 = vsyncpa %s9, 0
    loop: start=0, step=1, limit=6
    $region2: #{tpu_custom_call.1} parent=1 // loop_pre_header
      _
    $region3: #{tpu_custom_call.1} parent=1 // loop_header
      %s12 = sphi 0, %s16
      %p13 = scmp.ge.s32.totalorder %s12, 6
      %s22 = sphi 0, %s24
      %s25 = sphi 0, %s22
      %s26 = sphi 0, %s25
      %s42 = sphi 0, %s26
      %s46 = sphi 0, %s46
      %s48 = sphi 0, %s46
      %s49 = sphi 0, %s48
      %s63 = sphi 0, %s49
      %s93 = sphi 0, %s95
      %s96 = sphi 0, %s93
      %s97 = sphi 0, %s96
      %s113 = sphi 0, %s97
      %s119 = sphi 0, %s121
      %s122 = sphi 0, %s119
      %s123 = sphi 0, %s122
      %s139 = sphi 0, %s123
    $region4: #{tpu_custom_call.1} parent=1 // loop_header_branch
      %15 = sbr.rel (%p13) target = $region8
    $region5: #{tpu_custom_call.1} parent=1 // loop_body
      %s17 = ssub.s32 %s12, 1
      %s18 = ssub.s32 %s12, 2
      %s19 = sadd.s32 %s12, 1
      %s20 = ssub.s32 %s12, %s19
      %p21 = scmp.eq.s32.totalorder %s20, 0
      %s23 = sadd.s32 %s22, 1
      %s24 = scalar_select %p21, %s22, %s23
      %p27 = pneg %p21
      %p28 = scmp.eq.s32.totalorder %s12, 3
      %p29 = por %p27, %p28
      %p30 = scmp.ne.s32.totalorder %s22, %s25
      %p31 = scmp.eq.s32.totalorder %s12, 0
      %p32 = por %p30, %p31
      %p33 = scmp.ne.s32.totalorder %s22, %s25
      %p34 = scmp.eq.s32.totalorder %s17, 3
      %p35 = por %p33, %p34
      %p36 = scmp.ne.s32.totalorder %s25, %s26
      %p37 = scmp.eq.s32.totalorder %s17, 0
      %p38 = por %p36, %p37
      %p39 = scmp.ne.s32.totalorder %s25, %s26
      %p40 = scmp.eq.s32.totalorder %s18, 3
      %p41 = por %p39, %p40
      %p43 = scmp.ne.s32.totalorder %s26, %s42
      %p44 = scmp.eq.s32.totalorder %s18, 0
      %p45 = por %p43, %p44
      %s47 = sadd.s32 %s46, 1
      %p50 = scmp.eq.s32.totalorder %s12, 3
      %p51 = scmp.ne.s32.totalorder %s46, %s48
      %p52 = scmp.eq.s32.totalorder %s12, 0
      %p53 = por %p51, %p52
      %p54 = scmp.ne.s32.totalorder %s46, %s48
      %p55 = scmp.eq.s32.totalorder %s17, 3
      %p56 = por %p54, %p55
      %p57 = scmp.ne.s32.totalorder %s48, %s49
      %p58 = scmp.eq.s32.totalorder %s17, 0
      %p59 = por %p57, %p58
      %p60 = scmp.ne.s32.totalorder %s48, %s49
      %p61 = scmp.eq.s32.totalorder %s18, 3
      %p62 = por %p60, %p61
      %p64 = scmp.ne.s32.totalorder %s49, %s63
      %p65 = scmp.eq.s32.totalorder %s18, 0
      %p66 = por %p64, %p65
      %p67 = scmp.lt.s32.totalorder %s12, 0
      %s68 = ssub.s32 0, %s12
      %s69 = scalar_select %p67, %s68, %s12
      %s70 = sand.u32 %s69, 1
      %s71 = ssub.s32 0, %s70
      %s72 = scalar_select %p67, %s71, %s70
      %p73 = scmp.ne.s32.totalorder %s72, 0
      %p74 = scmp.lt.s32.totalorder %s72, 0
      %p75 = pnand %p74, %p73
      %p76 = pneg %p75
      %s77 = sadd.s32 %s72, 2
      %s78 = scalar_select %p76, %s77, %s72
      %p79 = scmp.lt.s32.totalorder %s19, 0
      %s80 = ssub.s32 0, %s19
      %s81 = scalar_select %p79, %s80, %s19
      %s82 = sand.u32 %s81, 1
      %s83 = ssub.s32 0, %s82
      %s84 = scalar_select %p79, %s83, %s82
      %p85 = scmp.ne.s32.totalorder %s84, 0
      %p86 = scmp.lt.s32.totalorder %s84, 0
      %p87 = pnand %p86, %p85
      %p88 = pneg %p87
      %s89 = sadd.s32 %s84, 2
      %s90 = scalar_select %p88, %s89, %s84
      %s91 = ssub.s32 %s78, %s90
      %p92 = scmp.eq.s32.totalorder %s91, 0
      %s94 = sadd.s32 %s93, 1
      %s95 = scalar_select %p92, %s93, %s94
      %p98 = pneg %p92
      %p99 = scmp.eq.s32.totalorder %s12, 3
      %p100 = por %p98, %p99
      %p101 = scmp.ne.s32.totalorder %s93, %s96
      %p102 = scmp.eq.s32.totalorder %s12, 0
      %p103 = por %p101, %p102
      %p104 = scmp.ne.s32.totalorder %s93, %s96
      %p105 = scmp.eq.s32.totalorder %s17, 3
      %p106 = por %p104, %p105
      %p107 = scmp.ne.s32.totalorder %s96, %s97
      %p108 = scmp.eq.s32.totalorder %s17, 0
      %p109 = por %p107, %p108
      %p110 = scmp.ne.s32.totalorder %s96, %s97
      %p111 = scmp.eq.s32.totalorder %s18, 3
      %p112 = por %p110, %p111
      %p114 = scmp.ne.s32.totalorder %s97, %s113
      %p115 = scmp.eq.s32.totalorder %s18, 0
      %p116 = por %p114, %p115
      %s117 = ssub.s32 %s12, %s19
      %p118 = scmp.eq.s32.totalorder %s117, 0
      %s120 = sadd.s32 %s119, 1
      %s121 = scalar_select %p118, %s119, %s120
      %p124 = pneg %p118
      %p125 = scmp.eq.s32.totalorder %s12, 3
      %p126 = por %p124, %p125
      %p127 = scmp.ne.s32.totalorder %s119, %s122
      %p128 = scmp.eq.s32.totalorder %s12, 0
      %p129 = por %p127, %p128
      %p130 = scmp.ne.s32.totalorder %s119, %s122
      %p131 = scmp.eq.s32.totalorder %s17, 3
      %p132 = por %p130, %p131
      %p133 = scmp.ne.s32.totalorder %s122, %s123
      %p134 = scmp.eq.s32.totalorder %s17, 0
      %p135 = por %p133, %p134
      %p136 = scmp.ne.s32.totalorder %s122, %s123
      %p137 = scmp.eq.s32.totalorder %s18, 3
      %p138 = por %p136, %p137
      %p140 = scmp.ne.s32.totalorder %s123, %s139
      %p141 = scmp.eq.s32.totalorder %s18, 0
      %p142 = por %p140, %p141
      %p143 = scmp.le.s32.totalorder 1, %s12
      %p144 = scmp.lt.s32.totalorder %s12, 5
      %p145 = pnand %p143, %p144
      %p146 = pneg %p145
      // Predicated region
      $region9: #{tpu_custom_call.1} parent=5 // pred_check
        _
      $region10: #{tpu_custom_call.1} parent=5 // pred_check_branch
        %148 = sbr.rel (%p145) target = $region12
      $region11: #{tpu_custom_call.1} parent=5 // pred_region
        %s149 = ssub.s32 %s12, 1
        // Predicated region
        $region13: #{tpu_custom_call.1} parent=11 // pred_check
          %p150 = pneg %p59
        $region14: #{tpu_custom_call.1} parent=11 // pred_check_branch
          %152 = sbr.rel (%p150) target = $region16
        $region15: #{tpu_custom_call.1} parent=11 // pred_region
          _
        $region16: #{tpu_custom_call.1} parent=11 // pred_fallthru
          _
      $region12: #{tpu_custom_call.1} parent=5 // pred_fallthru
        _
      %p153 = scmp.lt.s32.totalorder %s12, 4
      // Predicated region
      $region17: #{tpu_custom_call.1} parent=5 // pred_check
        %p154 = pneg %p153
      $region18: #{tpu_custom_call.1} parent=5 // pred_check_branch
        %156 = sbr.rel (%p154) target = $region20
      $region19: #{tpu_custom_call.1} parent=5 // pred_region
        // Predicated region
        $region21: #{tpu_custom_call.1} parent=19 // pred_check
          %p157 = pneg %p32
        $region22: #{tpu_custom_call.1} parent=19 // pred_check_branch
          %159 = sbr.rel (%p157) target = $region24
        $region23: #{tpu_custom_call.1} parent=19 // pred_region
          %p160 = scmp.lt.s32.totalorder %s12, 3
          %s161 = scalar_select %p160, %s12, 3
          %s162 = smul.addr %s161, 8
          %s163 = scalar_lea.vmem %s0, %s162
        $region24: #{tpu_custom_call.1} parent=19 // pred_fallthru
          _
        // Predicated region
        $region25: #{tpu_custom_call.1} parent=19 // pred_check
          %p164 = pneg %p103
        $region26: #{tpu_custom_call.1} parent=19 // pred_check_branch
          %166 = sbr.rel (%p164) target = $region28
        $region27: #{tpu_custom_call.1} parent=19 // pred_region
          %p167 = scmp.lt.s32.totalorder %s12, 0
          %s168 = ssub.s32 0, %s12
          %s169 = scalar_select %p167, %s168, %s12
          %s170 = sand.u32 %s169, 1
          %s171 = ssub.s32 0, %s170
          %s172 = scalar_select %p167, %s171, %s170
          %p173 = scmp.ne.s32.totalorder %s172, 0
          %p174 = scmp.lt.s32.totalorder %s172, 0
          %p175 = pnand %p174, %p173
          %p176 = pneg %p175
          %s177 = sadd.s32 %s172, 2
          %s178 = scalar_select %p176, %s177, %s172
          %p179 = scmp.lt.s32.totalorder %s178, 1
          %s180 = scalar_select %p179, %s178, 1
          %s181 = smul.addr %s180, 8
          %s182 = scalar_lea.vmem %s2, %s181
          %p183 = scmp.lt.s32.totalorder %s12, 0
          %s184 = ssub.s32 0, %s12
          %s185 = scalar_select %p183, %s184, %s12
          %s186 = sand.u32 %s185, 1
          %s187 = ssub.s32 0, %s186
          %s188 = scalar_select %p183, %s187, %s186
          %p189 = scmp.ne.s32.totalorder %s188, 0
          %p190 = scmp.lt.s32.totalorder %s188, 0
          %p191 = pnand %p190, %p189
          %p192 = pneg %p191
          %s193 = sadd.s32 %s188, 2
          %s194 = scalar_select %p192, %s193, %s188
        $region28: #{tpu_custom_call.1} parent=19 // pred_fallthru
          _
      $region20: #{tpu_custom_call.1} parent=5 // pred_fallthru
        _
      %p195 = scmp.le.s32.totalorder 1, %s12
      %p196 = scmp.lt.s32.totalorder %s12, 5
      %p197 = pnand %p195, %p196
      %p198 = pneg %p197
      // Predicated region
      $region29: #{tpu_custom_call.1} parent=5 // pred_check
        _
      $region30: #{tpu_custom_call.1} parent=5 // pred_check_branch
        %200 = sbr.rel (%p197) target = $region32
      $region31: #{tpu_custom_call.1} parent=5 // pred_region
        %s201 = ssub.s32 %s12, 1
        %p202 = scmp.lt.s32.totalorder %s17, 3
        %s203 = scalar_select %p202, %s17, 3
        %s204 = smul.addr %s203, 8
        %s205 = scalar_lea.vmem %s0, %s204
        %p206 = pneg %p38
        %p207 = pneg %p35
        %p208 = pneg %p59
        %p209 = pneg %p56
        %p210 = scmp.lt.s32.totalorder %s17, 0
        %s211 = ssub.s32 0, %s17
        %s212 = scalar_select %p210, %s211, %s17
        %s213 = sand.u32 %s212, 1
        %s214 = ssub.s32 0, %s213
        %s215 = scalar_select %p210, %s214, %s213
        %p216 = scmp.ne.s32.totalorder %s215, 0
        %p217 = scmp.lt.s32.totalorder %s215, 0
        %p218 = pnand %p217, %p216
        %p219 = pneg %p218
        %s220 = sadd.s32 %s215, 2
        %s221 = scalar_select %p219, %s220, %s215
        %p222 = scmp.lt.s32.totalorder %s221, 1
        %s223 = scalar_select %p222, %s221, 1
        %s224 = smul.addr %s223, 8
        %s225 = scalar_lea.vmem %s2, %s224
        %p226 = pneg %p109
        %p227 = pneg %p106
        %p228 = pneg %p135
        %p229 = pneg %p132
        %s230 = sand.u32 %s122, 1
        %s231 = scalar_lea.sflag [#allocation3], %s230
        %s232 = sand.u32 %s122, 1
        %s233 = smul.addr %s232, 8
        %s234 = scalar_lea.vmem [#allocation2], %s233
        %p235 = scmp.lt.s32.totalorder %s17, 3
        %s236 = scalar_select %p235, %s17, 3
        %s237 = smul.addr %s236, 8
        %s238 = scalar_lea.vmem %s0, %s237
        %p239 = scmp.lt.s32.totalorder %s17, 0
        %s240 = ssub.s32 0, %s17
        %s241 = scalar_select %p239, %s240, %s17
        %s242 = sand.u32 %s241, 1
        %s243 = ssub.s32 0, %s242
        %s244 = scalar_select %p239, %s243, %s242
        %p245 = scmp.ne.s32.totalorder %s244, 0
        %p246 = scmp.lt.s32.totalorder %s244, 0
        %p247 = pnand %p246, %p245
        %p248 = pneg %p247
        %s249 = sadd.s32 %s244, 2
        %s250 = scalar_select %p248, %s249, %s244
        %p251 = scmp.lt.s32.totalorder %s250, 1
        %s252 = scalar_select %p251, %s250, 1
        %s253 = smul.addr %s252, 8
        %s254 = scalar_lea.vmem %s2, %s253
        %p255 = scmp.lt.s32.totalorder %s17, 0
        %s256 = ssub.s32 0, %s17
        %s257 = scalar_select %p255, %s256, %s17
        %s258 = sand.u32 %s257, 1
        %s259 = ssub.s32 0, %s258
        %s260 = scalar_select %p255, %s259, %s258
        %p261 = scmp.ne.s32.totalorder %s260, 0
        %p262 = scmp.lt.s32.totalorder %s260, 0
        %p263 = pnand %p262, %p261
        %p264 = pneg %p263
        %s265 = sadd.s32 %s260, 2
        %s266 = scalar_select %p264, %s265, %s260
        %v267 = vld [vmem:[%s238] sm:$0xff]
        %v268 = vld [vmem:[%s1] sm:$0xff]
        %v269 = vld [vmem:[%s254] sm:$0xff]
        %vm270 = vcmask 64512
        %v272 = vsel %vm270, %v267, 0
        %274 = vmatprep.subr.mxu0 0.0
        %v275 = vand.u32 %v268, 4294901760
        %276 = vmatpush1.msra.mxu0 %v275
        %277 = vmatprep.subr.mxu0 0.0
        %278 = vmatpush1.msra.mxu0 0.0
        %279 = vmatprep.subr.mxu0 0.0
        %280 = vmatpush1.msra.mxu0 0.0
        %281 = vmatprep.subr.mxu0 0.0
        %282 = vmatpush1.msra.mxu0 0.0
        %283 = vmatprep.subr.mxu0 0.0
        %284 = vmatpush1.msra.mxu0 0.0
        %285 = vmatprep.subr.mxu0 0.0
        %286 = vmatpush1.msra.mxu0 0.0
        %287 = vmatprep.subr.mxu0 0.0
        %288 = vmatpush1.msra.mxu0 0.0
        %289 = vmatprep.subr.mxu0 0.0
        %290 = vmatpush1.msra.mxu0 0.0
        %291 = vmatprep.subr.mxu0 0.0
        %292 = vmatpush1.msra.mxu0 0.0
        %293 = vmatprep.subr.mxu0 0.0
        %294 = vmatpush1.msra.mxu0 0.0
        %295 = vmatprep.subr.mxu0 0.0
        %296 = vmatpush1.msra.mxu0 0.0
        %297 = vmatprep.subr.mxu0 0.0
        %298 = vmatpush1.msra.mxu0 0.0
        %299 = vmatprep.subr.mxu0 0.0
        %300 = vmatpush1.msra.mxu0 0.0
        %301 = vmatprep.subr.mxu0 0.0
        %302 = vmatpush1.msra.mxu0 0.0
        %303 = vmatprep.subr.mxu0 0.0
        %304 = vmatpush1.msra.mxu0 0.0
        %305 = vmatprep.subr.mxu0 0.0
        %306 = vmatpush1.msra.mxu0 0.0
        %307 = vmatprep.subr.mxu0 0.0
        %308 = vmatpush1.msra.mxu0 0.0
        %309 = vmatprep.subr.mxu0 0.0
        %310 = vmatpush1.msra.mxu0 0.0
        %311 = vmatprep.subr.mxu0 0.0
        %312 = vmatpush1.msra.mxu0 0.0
        %313 = vmatprep.subr.mxu0 0.0
        %314 = vmatpush1.msra.mxu0 0.0
        %315 = vmatprep.subr.mxu0 0.0
        %316 = vmatpush1.msra.mxu0 0.0
        %317 = vmatprep.subr.mxu0 0.0
        %318 = vmatpush1.msra.mxu0 0.0
        %319 = vmatprep.subr.mxu0 0.0
        %320 = vmatpush1.msra.mxu0 0.0
        %321 = vmatprep.subr.mxu0 0.0
        %322 = vmatpush1.msra.mxu0 0.0
        %323 = vmatprep.subr.mxu0 0.0
        %324 = vmatpush1.msra.mxu0 0.0
        %325 = vmatprep.subr.mxu0 0.0
        %326 = vmatpush1.msra.mxu0 0.0
        %327 = vmatprep.subr.mxu0 0.0
        %328 = vmatpush1.msra.mxu0 0.0
        %329 = vmatprep.subr.mxu0 0.0
        %330 = vmatpush1.msra.mxu0 0.0
        %331 = vmatprep.subr.mxu0 0.0
        %332 = vmatpush1.msra.mxu0 0.0
        %333 = vmatprep.subr.mxu0 0.0
        %334 = vmatpush1.msra.mxu0 0.0
        %335 = vmatprep.subr.mxu0 0.0
        %336 = vmatpush1.msra.mxu0 0.0
        %337 = vmatprep.subr.mxu0 0.0
        %338 = vmatpush1.msra.mxu0 0.0
        %339 = vmatprep.mubr.f32.mxu0 0.0
        %v340 = vand.u32 %v272, 4294901760
        %v341 = vsub.f32 %v272, %v340
        %v342 = vand.u32 %v341, 4294901760
        %v343 = vsub.f32 %v341, %v342
        %v344 = vand.u32 %v343, 4294901760
        %345 = vmatmul.mubr.f32.gmra.mrb[0].mxu0 %v344
        %v346 = vpop.f32.mrb[0].mxu0
        %v347 = vadd.f32 %v269, %v346
        %v348 = vpop.f32.mrb[0].mxu0
        %349 = vdwg.mxu0
        %350 = vmatprep.subr.mxu0 0.0
        %v351 = vand.u32 %v268, 4294901760
        %v352 = vsub.f32 %v268, %v351
        %v353 = vand.u32 %v352, 4294901760
        %v354 = vsub.f32 %v352, %v353
        %v355 = vand.u32 %v354, 4294901760
        %356 = vmatpush1.msra.mxu0 %v355
        %357 = vmatprep.subr.mxu0 0.0
        %358 = vmatpush1.msra.mxu0 0.0
        %359 = vmatprep.subr.mxu0 0.0
        %360 = vmatpush1.msra.mxu0 0.0
        %361 = vmatprep.subr.mxu0 0.0
        %362 = vmatpush1.msra.mxu0 0.0
        %363 = vmatprep.subr.mxu0 0.0
        %364 = vmatpush1.msra.mxu0 0.0
        %365 = vmatprep.subr.mxu0 0.0
        %366 = vmatpush1.msra.mxu0 0.0
        %367 = vmatprep.subr.mxu0 0.0
        %368 = vmatpush1.msra.mxu0 0.0
        %369 = vmatprep.subr.mxu0 0.0
        %370 = vmatpush1.msra.mxu0 0.0
        %371 = vmatprep.subr.mxu0 0.0
        %372 = vmatpush1.msra.mxu0 0.0
        %373 = vmatprep.subr.mxu0 0.0
        %374 = vmatpush1.msra.mxu0 0.0
        %375 = vmatprep.subr.mxu0 0.0
        %376 = vmatpush1.msra.mxu0 0.0
        %377 = vmatprep.subr.mxu0 0.0
        %378 = vmatpush1.msra.mxu0 0.0
        %379 = vmatprep.subr.mxu0 0.0
        %380 = vmatpush1.msra.mxu0 0.0
        %381 = vmatprep.subr.mxu0 0.0
        %382 = vmatpush1.msra.mxu0 0.0
        %383 = vmatprep.subr.mxu0 0.0
        %384 = vmatpush1.msra.mxu0 0.0
        %385 = vmatprep.subr.mxu0 0.0
        %386 = vmatpush1.msra.mxu0 0.0
        %387 = vmatprep.subr.mxu0 0.0
        %388 = vmatpush1.msra.mxu0 0.0
        %389 = vmatprep.subr.mxu0 0.0
        %390 = vmatpush1.msra.mxu0 0.0
        %391 = vmatprep.subr.mxu0 0.0
        %392 = vmatpush1.msra.mxu0 0.0
        %393 = vmatprep.subr.mxu0 0.0
        %394 = vmatpush1.msra.mxu0 0.0
        %395 = vmatprep.subr.mxu0 0.0
        %396 = vmatpush1.msra.mxu0 0.0
        %397 = vmatprep.subr.mxu0 0.0
        %398 = vmatpush1.msra.mxu0 0.0
        %399 = vmatprep.subr.mxu0 0.0
        %400 = vmatpush1.msra.mxu0 0.0
        %401 = vmatprep.subr.mxu0 0.0
        %402 = vmatpush1.msra.mxu0 0.0
        %403 = vmatprep.subr.mxu0 0.0
        %404 = vmatpush1.msra.mxu0 0.0
        %405 = vmatprep.subr.mxu0 0.0
        %406 = vmatpush1.msra.mxu0 0.0
        %407 = vmatprep.subr.mxu0 0.0
        %408 = vmatpush1.msra.mxu0 0.0
        %409 = vmatprep.subr.mxu0 0.0
        %410 = vmatpush1.msra.mxu0 0.0
        %411 = vmatprep.subr.mxu0 0.0
        %412 = vmatpush1.msra.mxu0 0.0
        %413 = vmatprep.subr.mxu0 0.0
        %414 = vmatpush1.msra.mxu0 0.0
        %415 = vmatprep.subr.mxu0 0.0
        %416 = vmatpush1.msra.mxu0 0.0
        %417 = vmatprep.subr.mxu0 0.0
        %418 = vmatpush1.msra.mxu0 0.0
        %419 = vmatprep.mubr.f32.mxu0 0.0
        %v420 = vand.u32 %v272, 4294901760
        %421 = vmatmul.mubr.f32.gmra.mrb[0].mxu0 %v420
        %v422 = vpop.f32.mrb[0].mxu0
        %v423 = vadd.f32 %v347, %v422
        %v424 = vpop.f32.mrb[0].mxu0
        %425 = vdwg.mxu0
        %426 = vmatprep.subr.mxu0 0.0
        %v427 = vand.u32 %v268, 4294901760
        %v428 = vsub.f32 %v268, %v427
        %429 = vmatpush1.msra.mxu0 %v428
        %430 = vmatprep.subr.mxu0 0.0
        %431 = vmatpush1.msra.mxu0 0.0
        %432 = vmatprep.subr.mxu0 0.0
        %433 = vmatpush1.msra.mxu0 0.0
        %434 = vmatprep.subr.mxu0 0.0
        %435 = vmatpush1.msra.mxu0 0.0
        %436 = vmatprep.subr.mxu0 0.0
        %437 = vmatpush1.msra.mxu0 0.0
        %438 = vmatprep.subr.mxu0 0.0
        %439 = vmatpush1.msra.mxu0 0.0
        %440 = vmatprep.subr.mxu0 0.0
        %441 = vmatpush1.msra.mxu0 0.0
        %442 = vmatprep.subr.mxu0 0.0
        %443 = vmatpush1.msra.mxu0 0.0
        %444 = vmatprep.subr.mxu0 0.0
        %445 = vmatpush1.msra.mxu0 0.0
        %446 = vmatprep.subr.mxu0 0.0
        %447 = vmatpush1.msra.mxu0 0.0
        %448 = vmatprep.subr.mxu0 0.0
        %449 = vmatpush1.msra.mxu0 0.0
        %450 = vmatprep.subr.mxu0 0.0
        %451 = vmatpush1.msra.mxu0 0.0
        %452 = vmatprep.subr.mxu0 0.0
        %453 = vmatpush1.msra.mxu0 0.0
        %454 = vmatprep.subr.mxu0 0.0
        %455 = vmatpush1.msra.mxu0 0.0
        %456 = vmatprep.subr.mxu0 0.0
        %457 = vmatpush1.msra.mxu0 0.0
        %458 = vmatprep.subr.mxu0 0.0
        %459 = vmatpush1.msra.mxu0 0.0
        %460 = vmatprep.subr.mxu0 0.0
        %461 = vmatpush1.msra.mxu0 0.0
        %462 = vmatprep.subr.mxu0 0.0
        %463 = vmatpush1.msra.mxu0 0.0
        %464 = vmatprep.subr.mxu0 0.0
        %465 = vmatpush1.msra.mxu0 0.0
        %466 = vmatprep.subr.mxu0 0.0
        %467 = vmatpush1.msra.mxu0 0.0
        %468 = vmatprep.subr.mxu0 0.0
        %469 = vmatpush1.msra.mxu0 0.0
        %470 = vmatprep.subr.mxu0 0.0
        %471 = vmatpush1.msra.mxu0 0.0
        %472 = vmatprep.subr.mxu0 0.0
        %473 = vmatpush1.msra.mxu0 0.0
        %474 = vmatprep.subr.mxu0 0.0
        %475 = vmatpush1.msra.mxu0 0.0
        %476 = vmatprep.subr.mxu0 0.0
        %477 = vmatpush1.msra.mxu0 0.0
        %478 = vmatprep.subr.mxu0 0.0
        %479 = vmatpush1.msra.mxu0 0.0
        %480 = vmatprep.subr.mxu0 0.0
        %481 = vmatpush1.msra.mxu0 0.0
        %482 = vmatprep.subr.mxu0 0.0
        %483 = vmatpush1.msra.mxu0 0.0
        %484 = vmatprep.subr.mxu0 0.0
        %485 = vmatpush1.msra.mxu0 0.0
        %486 = vmatprep.subr.mxu0 0.0
        %487 = vmatpush1.msra.mxu0 0.0
        %488 = vmatprep.subr.mxu0 0.0
        %489 = vmatpush1.msra.mxu0 0.0
        %490 = vmatprep.subr.mxu0 0.0
        %491 = vmatpush1.msra.mxu0 0.0
        %492 = vmatprep.mubr.f32.mxu0 0.0
        %v493 = vand.u32 %v272, 4294901760
        %v494 = vsub.f32 %v272, %v493
        %495 = vmatmul.mubr.f32.gmra.mrb[0].mxu0 %v494
        %v496 = vpop.f32.mrb[0].mxu0
        %v497 = vadd.f32 %v423, %v496
        %v498 = vpop.f32.mrb[0].mxu0
        %499 = vdwg.mxu0
        %500 = vmatprep.subr.mxu0 0.0
        %v501 = vand.u32 %v268, 4294901760
        %502 = vmatpush1.msra.mxu0 %v501
        %503 = vmatprep.subr.mxu0 0.0
        %504 = vmatpush1.msra.mxu0 0.0
        %505 = vmatprep.subr.mxu0 0.0
        %506 = vmatpush1.msra.mxu0 0.0
        %507 = vmatprep.subr.mxu0 0.0
        %508 = vmatpush1.msra.mxu0 0.0
        %509 = vmatprep.subr.mxu0 0.0
        %510 = vmatpush1.msra.mxu0 0.0
        %511 = vmatprep.subr.mxu0 0.0
        %512 = vmatpush1.msra.mxu0 0.0
        %513 = vmatprep.subr.mxu0 0.0
        %514 = vmatpush1.msra.mxu0 0.0
        %515 = vmatprep.subr.mxu0 0.0
        %516 = vmatpush1.msra.mxu0 0.0
        %517 = vmatprep.subr.mxu0 0.0
        %518 = vmatpush1.msra.mxu0 0.0
        %519 = vmatprep.subr.mxu0 0.0
        %520 = vmatpush1.msra.mxu0 0.0
        %521 = vmatprep.subr.mxu0 0.0
        %522 = vmatpush1.msra.mxu0 0.0
        %523 = vmatprep.subr.mxu0 0.0
        %524 = vmatpush1.msra.mxu0 0.0
        %525 = vmatprep.subr.mxu0 0.0
        %526 = vmatpush1.msra.mxu0 0.0
        %527 = vmatprep.subr.mxu0 0.0
        %528 = vmatpush1.msra.mxu0 0.0
        %529 = vmatprep.subr.mxu0 0.0
        %530 = vmatpush1.msra.mxu0 0.0
        %531 = vmatprep.subr.mxu0 0.0
        %532 = vmatpush1.msra.mxu0 0.0
        %533 = vmatprep.subr.mxu0 0.0
        %534 = vmatpush1.msra.mxu0 0.0
        %535 = vmatprep.subr.mxu0 0.0
        %536 = vmatpush1.msra.mxu0 0.0
        %537 = vmatprep.subr.mxu0 0.0
        %538 = vmatpush1.msra.mxu0 0.0
        %539 = vmatprep.subr.mxu0 0.0
        %540 = vmatpush1.msra.mxu0 0.0
        %541 = vmatprep.subr.mxu0 0.0
        %542 = vmatpush1.msra.mxu0 0.0
        %543 = vmatprep.subr.mxu0 0.0
        %544 = vmatpush1.msra.mxu0 0.0
        %545 = vmatprep.subr.mxu0 0.0
        %546 = vmatpush1.msra.mxu0 0.0
        %547 = vmatprep.subr.mxu0 0.0
        %548 = vmatpush1.msra.mxu0 0.0
        %549 = vmatprep.subr.mxu0 0.0
        %550 = vmatpush1.msra.mxu0 0.0
        %551 = vmatprep.subr.mxu0 0.0
        %552 = vmatpush1.msra.mxu0 0.0
        %553 = vmatprep.subr.mxu0 0.0
        %554 = vmatpush1.msra.mxu0 0.0
        %555 = vmatprep.subr.mxu0 0.0
        %556 = vmatpush1.msra.mxu0 0.0
        %557 = vmatprep.subr.mxu0 0.0
        %558 = vmatpush1.msra.mxu0 0.0
        %559 = vmatprep.subr.mxu0 0.0
        %560 = vmatpush1.msra.mxu0 0.0
        %561 = vmatprep.subr.mxu0 0.0
        %562 = vmatpush1.msra.mxu0 0.0
        %563 = vmatprep.subr.mxu0 0.0
        %564 = vmatpush1.msra.mxu0 0.0
        %565 = vmatprep.mubr.f32.mxu0 0.0
        %v566 = vand.u32 %v272, 4294901760
        %v567 = vsub.f32 %v272, %v566
        %v568 = vand.u32 %v567, 4294901760
        %569 = vmatmul.mubr.f32.gmra.mrb[0].mxu0 %v568
        %v570 = vpop.f32.mrb[0].mxu0
        %v571 = vadd.f32 %v497, %v570
        %v572 = vpop.f32.mrb[0].mxu0
        %573 = vdwg.mxu0
        %574 = vmatprep.subr.mxu0 0.0
        %v575 = vand.u32 %v268, 4294901760
        %v576 = vsub.f32 %v268, %v575
        %v577 = vand.u32 %v576, 4294901760
        %578 = vmatpush1.msra.mxu0 %v577
        %579 = vmatprep.subr.mxu0 0.0
        %580 = vmatpush1.msra.mxu0 0.0
        %581 = vmatprep.subr.mxu0 0.0
        %582 = vmatpush1.msra.mxu0 0.0
        %583 = vmatprep.subr.mxu0 0.0
        %584 = vmatpush1.msra.mxu0 0.0
        %585 = vmatprep.subr.mxu0 0.0
        %586 = vmatpush1.msra.mxu0 0.0
        %587 = vmatprep.subr.mxu0 0.0
        %588 = vmatpush1.msra.mxu0 0.0
        %589 = vmatprep.subr.mxu0 0.0
        %590 = vmatpush1.msra.mxu0 0.0
        %591 = vmatprep.subr.mxu0 0.0
        %592 = vmatpush1.msra.mxu0 0.0
        %593 = vmatprep.subr.mxu0 0.0
        %594 = vmatpush1.msra.mxu0 0.0
        %595 = vmatprep.subr.mxu0 0.0
        %596 = vmatpush1.msra.mxu0 0.0
        %597 = vmatprep.subr.mxu0 0.0
        %598 = vmatpush1.msra.mxu0 0.0
        %599 = vmatprep.subr.mxu0 0.0
        %600 = vmatpush1.msra.mxu0 0.0
        %601 = vmatprep.subr.mxu0 0.0
        %602 = vmatpush1.msra.mxu0 0.0
        %603 = vmatprep.subr.mxu0 0.0
        %604 = vmatpush1.msra.mxu0 0.0
        %605 = vmatprep.subr.mxu0 0.0
        %606 = vmatpush1.msra.mxu0 0.0
        %607 = vmatprep.subr.mxu0 0.0
        %608 = vmatpush1.msra.mxu0 0.0
        %609 = vmatprep.subr.mxu0 0.0
        %610 = vmatpush1.msra.mxu0 0.0
        %611 = vmatprep.subr.mxu0 0.0
        %612 = vmatpush1.msra.mxu0 0.0
        %613 = vmatprep.subr.mxu0 0.0
        %614 = vmatpush1.msra.mxu0 0.0
        %615 = vmatprep.subr.mxu0 0.0
        %616 = vmatpush1.msra.mxu0 0.0
        %617 = vmatprep.subr.mxu0 0.0
        %618 = vmatpush1.msra.mxu0 0.0
        %619 = vmatprep.subr.mxu0 0.0
        %620 = vmatpush1.msra.mxu0 0.0
        %621 = vmatprep.subr.mxu0 0.0
        %622 = vmatpush1.msra.mxu0 0.0
        %623 = vmatprep.subr.mxu0 0.0
        %624 = vmatpush1.msra.mxu0 0.0
        %625 = vmatprep.subr.mxu0 0.0
        %626 = vmatpush1.msra.mxu0 0.0
        %627 = vmatprep.subr.mxu0 0.0
        %628 = vmatpush1.msra.mxu0 0.0
        %629 = vmatprep.subr.mxu0 0.0
        %630 = vmatpush1.msra.mxu0 0.0
        %631 = vmatprep.subr.mxu0 0.0
        %632 = vmatpush1.msra.mxu0 0.0
        %633 = vmatprep.subr.mxu0 0.0
        %634 = vmatpush1.msra.mxu0 0.0
        %635 = vmatprep.subr.mxu0 0.0
        %636 = vmatpush1.msra.mxu0 0.0
        %637 = vmatprep.subr.mxu0 0.0
        %638 = vmatpush1.msra.mxu0 0.0
        %639 = vmatprep.subr.mxu0 0.0
        %640 = vmatpush1.msra.mxu0 0.0
        %641 = vmatprep.mubr.f32.mxu0 0.0
        %v642 = vand.u32 %v272, 4294901760
        %643 = vmatmul.mubr.f32.gmra.mrb[0].mxu0 %v642
        %v644 = vpop.f32.mrb[0].mxu0
        %v645 = vadd.f32 %v571, %v644
        %v646 = vpop.f32.mrb[0].mxu0
        %647 = vdwg.mxu0
        %648 = vmatprep.subr.mxu0 0.0
        %v649 = vand.u32 %v268, 4294901760
        %650 = vmatpush1.msra.mxu0 %v649
        %651 = vmatprep.subr.mxu0 0.0
        %652 = vmatpush1.msra.mxu0 0.0
        %653 = vmatprep.subr.mxu0 0.0
        %654 = vmatpush1.msra.mxu0 0.0
        %655 = vmatprep.subr.mxu0 0.0
        %656 = vmatpush1.msra.mxu0 0.0
        %657 = vmatprep.subr.mxu0 0.0
        %658 = vmatpush1.msra.mxu0 0.0
        %659 = vmatprep.subr.mxu0 0.0
        %660 = vmatpush1.msra.mxu0 0.0
        %661 = vmatprep.subr.mxu0 0.0
        %662 = vmatpush1.msra.mxu0 0.0
        %663 = vmatprep.subr.mxu0 0.0
        %664 = vmatpush1.msra.mxu0 0.0
        %665 = vmatprep.subr.mxu0 0.0
        %666 = vmatpush1.msra.mxu0 0.0
        %667 = vmatprep.subr.mxu0 0.0
        %668 = vmatpush1.msra.mxu0 0.0
        %669 = vmatprep.subr.mxu0 0.0
        %670 = vmatpush1.msra.mxu0 0.0
        %671 = vmatprep.subr.mxu0 0.0
        %672 = vmatpush1.msra.mxu0 0.0
        %673 = vmatprep.subr.mxu0 0.0
        %674 = vmatpush1.msra.mxu0 0.0
        %675 = vmatprep.subr.mxu0 0.0
        %676 = vmatpush1.msra.mxu0 0.0
        %677 = vmatprep.subr.mxu0 0.0
        %678 = vmatpush1.msra.mxu0 0.0
        %679 = vmatprep.subr.mxu0 0.0
        %680 = vmatpush1.msra.mxu0 0.0
        %681 = vmatprep.subr.mxu0 0.0
        %682 = vmatpush1.msra.mxu0 0.0
        %683 = vmatprep.subr.mxu0 0.0
        %684 = vmatpush1.msra.mxu0 0.0
        %685 = vmatprep.subr.mxu0 0.0
        %686 = vmatpush1.msra.mxu0 0.0
        %687 = vmatprep.subr.mxu0 0.0
        %688 = vmatpush1.msra.mxu0 0.0
        %689 = vmatprep.subr.mxu0 0.0
        %690 = vmatpush1.msra.mxu0 0.0
        %691 = vmatprep.subr.mxu0 0.0
        %692 = vmatpush1.msra.mxu0 0.0
        %693 = vmatprep.subr.mxu0 0.0
        %694 = vmatpush1.msra.mxu0 0.0
        %695 = vmatprep.subr.mxu0 0.0
        %696 = vmatpush1.msra.mxu0 0.0
        %697 = vmatprep.subr.mxu0 0.0
        %698 = vmatpush1.msra.mxu0 0.0
        %699 = vmatprep.subr.mxu0 0.0
        %700 = vmatpush1.msra.mxu0 0.0
        %701 = vmatprep.subr.mxu0 0.0
        %702 = vmatpush1.msra.mxu0 0.0
        %703 = vmatprep.subr.mxu0 0.0
        %704 = vmatpush1.msra.mxu0 0.0
        %705 = vmatprep.subr.mxu0 0.0
        %706 = vmatpush1.msra.mxu0 0.0
        %707 = vmatprep.subr.mxu0 0.0
        %708 = vmatpush1.msra.mxu0 0.0
        %709 = vmatprep.subr.mxu0 0.0
        %710 = vmatpush1.msra.mxu0 0.0
        %711 = vmatprep.subr.mxu0 0.0
        %712 = vmatpush1.msra.mxu0 0.0
        %713 = vmatprep.mubr.f32.mxu0 0.0
        %v714 = vand.u32 %v272, 4294901760
        %715 = vmatmul.mubr.f32.gmra.mrb[0].mxu0 %v714
        %v716 = vpop.f32.mrb[0].mxu0
        %v717 = vadd.f32 %v645, %v716
        %v718 = vpop.f32.mrb[0].mxu0
        %719 = vdwg.mxu0
        %vm720 = vcmask 261120
        %721 = vst.msk [vmem:[%s234] sm:$0xff] %vm720, %v717
        %s722 = sand.u32 %s122, 1
        %s723 = scalar_lea.sflag [#allocation3], %s722
        %s724 = sand.u32 %s122, 1
        %s725 = smul.addr %s724, 8
        %s726 = scalar_lea.vmem [#allocation2], %s725
        // Predicated region
        $region33: #{tpu_custom_call.1} parent=31 // pred_check
          %p727 = pneg %p132
        $region34: #{tpu_custom_call.1} parent=31 // pred_check_branch
          %729 = sbr.rel (%p727) target = $region36
        $region35: #{tpu_custom_call.1} parent=31 // pred_region
          %s731 = ssub.s32 128, 128
          %732 = vsyncadd %s723, %s731
          %s733 = smul.addr %s17, 128
          %s734 = scalar_lea.hbm %s3, %s733
          %s736 = sshll.u32 %s726, 4
          %s737 = int_to_ptr.vmem [resolvable:$true] %s736
          %739 = dma.vmem_to_hbm [thread:$0]  %s737, 128, %s734, %s723
        $region36: #{tpu_custom_call.1} parent=31 // pred_fallthru
          _
      $region32: #{tpu_custom_call.1} parent=5 // pred_fallthru
        _
      %p740 = scmp.le.s32.totalorder 2, %s12
      // Predicated region
      $region37: #{tpu_custom_call.1} parent=5 // pred_check
        %p741 = pneg %p740
      $region38: #{tpu_custom_call.1} parent=5 // pred_check_branch
        %743 = sbr.rel (%p741) target = $region40
      $region39: #{tpu_custom_call.1} parent=5 // pred_region
        %s744 = ssub.s32 %s12, 2
        // Predicated region
        $region41: #{tpu_custom_call.1} parent=39 // pred_check
          %p745 = pneg %p138
        $region42: #{tpu_custom_call.1} parent=39 // pred_check_branch
          %747 = sbr.rel (%p745) target = $region44
        $region43: #{tpu_custom_call.1} parent=39 // pred_region
          %s748 = sand.u32 %s123, 1
          %s749 = scalar_lea.sflag [#allocation3], %s748
          %s750 = sand.u32 %s123, 1
          %s751 = smul.addr %s750, 8
          %s752 = scalar_lea.vmem [#allocation2], %s751
          %753 = dma.done %s749, 128
        $region44: #{tpu_custom_call.1} parent=39 // pred_fallthru
          _
      $region40: #{tpu_custom_call.1} parent=5 // pred_fallthru
        _
    $region6: #{tpu_custom_call.1} parent=1 // loop_footer
      %s16 = sadd.s32 1, %s12
    $region7: #{tpu_custom_call.1} parent=1 // loop_footer_branch
      %11 = sbr.rel target = $region3
    $region8: #{tpu_custom_call.1} parent=1 // loop_exit
      _
    %754 = vsyncpa [#allocation3], 1
    %s755 = scalar_lea.sflag [#allocation3], 1
    %756 = vsyncpa %s755, 1

// kernel: tpu_custom_call.1
$region0: #{tpu_custom_call.1}
  #allocation0 [shape = 'u32[]', space=smem, size = 0x4, offset = 0x4, fixed_abs, tag = 'smem constant byte address 0x4 - core index']
  #allocation1 [shape = 'u32[144,128]{1,0:T(1,128)}', space=vmem, size = 0x12000, scoped, tag = 'internal scratch']
  %s0 = inlined_call_operand.vmem [shape: f32[32,8], index: 0, kind: input, shape index: {}]
  %s1 = inlined_call_operand.vmem [shape: f32[8,32], index: 1, kind: input, shape index: {}]
  %s2 = inlined_call_operand.vmem [shape: f32[16,32], index: 2, kind: input, shape index: {}]
  %s3 = inlined_call_operand.hbm [shape: f32[32,32], index: 3, kind: output, shape index: {}]
  %s4 = sld [smem:[#allocation0]]
  $region45: #{tpu_custom_call.1} parent=0
    _
  %s6 = ssub.s32 1, %s4
  %s7 = scalar_select 0, %s6, %s4
  $region1: #{tpu_custom_call.1} parent=0
    #allocation2 [shape = 'u8[8192]{0}', space=vmem, size = 0x2000, scoped, tag = 'output window, operand 0']
    #allocation3 [shape = 's32[2]{0}', space=sflag, size = 0x8, scoped, tag = 'scoped memory for tpu_custom_call.1']
    %8 = vsyncpa [#allocation3], 0
    %s9 = scalar_lea.sflag [#allocation3], 1
    %10 = vsyncpa %s9, 0
    loop: start=0, step=1, limit=6
    $region2: #{tpu_custom_call.1} parent=1 // loop_pre_header
      _
    $region3: #{tpu_custom_call.1} parent=1 // loop_header
      %s12 = sphi 0, %s16
      %p13 = scmp.ge.s32.totalorder %s12, 6
      %s22 = sphi 0, %s24
      %s25 = sphi 0, %s22
      %s26 = sphi 0, %s25
      %s42 = sphi 0, %s26
      %s46 = sphi 0, %s46
      %s48 = sphi 0, %s46
      %s49 = sphi 0, %s48
      %s63 = sphi 0, %s49
      %s93 = sphi 0, %s95
      %s96 = sphi 0, %s93
      %s97 = sphi 0, %s96
      %s113 = sphi 0, %s97
      %s119 = sphi 0, %s121
      %s122 = sphi 0, %s119
      %s123 = sphi 0, %s122
      %s139 = sphi 0, %s123
    $region4: #{tpu_custom_call.1} parent=1 // loop_header_branch
      %15 = sbr.rel (%p13) target = $region8
    $region5: #{tpu_custom_call.1} parent=1 // loop_body
      %s17 = ssub.s32 %s12, 1
      %s18 = ssub.s32 %s12, 2
      %s19 = sadd.s32 %s12, 1
      %s20 = ssub.s32 %s12, %s19
      %p21 = scmp.eq.s32.totalorder %s20, 0
      %s23 = sadd.s32 %s22, 1
      %s24 = scalar_select %p21, %s22, %s23
      %p27 = pneg %p21
      %p28 = scmp.eq.s32.totalorder %s12, 3
      %p29 = por %p27, %p28
      %p30 = scmp.ne.s32.totalorder %s22, %s25
      %p31 = scmp.eq.s32.totalorder %s12, 0
      %p32 = por %p30, %p31
      %p33 = scmp.ne.s32.totalorder %s22, %s25
      %p34 = scmp.eq.s32.totalorder %s17, 3
      %p35 = por %p33, %p34
      %p36 = scmp.ne.s32.totalorder %s25, %s26
      %p37 = scmp.eq.s32.totalorder %s17, 0
      %p38 = por %p36, %p37
      %p39 = scmp.ne.s32.totalorder %s25, %s26
      %p40 = scmp.eq.s32.totalorder %s18, 3
      %p41 = por %p39, %p40
      %p43 = scmp.ne.s32.totalorder %s26, %s42
      %p44 = scmp.eq.s32.totalorder %s18, 0
      %p45 = por %p43, %p44
      %s47 = sadd.s32 %s46, 1
      %p50 = scmp.eq.s32.totalorder %s12, 3
      %p51 = scmp.ne.s32.totalorder %s46, %s48
      %p52 = scmp.eq.s32.totalorder %s12, 0
      %p53 = por %p51, %p52
      %p54 = scmp.ne.s32.totalorder %s46, %s48
      %p55 = scmp.eq.s32.totalorder %s17, 3
      %p56 = por %p54, %p55
      %p57 = scmp.ne.s32.totalorder %s48, %s49
      %p58 = scmp.eq.s32.totalorder %s17, 0
      %p59 = por %p57, %p58
      %p60 = scmp.ne.s32.totalorder %s48, %s49
      %p61 = scmp.eq.s32.totalorder %s18, 3
      %p62 = por %p60, %p61
      %p64 = scmp.ne.s32.totalorder %s49, %s63
      %p65 = scmp.eq.s32.totalorder %s18, 0
      %p66 = por %p64, %p65
      %p67 = scmp.lt.s32.totalorder %s12, 0
      %s68 = ssub.s32 0, %s12
      %s69 = scalar_select %p67, %s68, %s12
      %s70 = sand.u32 %s69, 1
      %s71 = ssub.s32 0, %s70
      %s72 = scalar_select %p67, %s71, %s70
      %p73 = scmp.ne.s32.totalorder %s72, 0
      %p74 = scmp.lt.s32.totalorder %s72, 0
      %p75 = pnand %p74, %p73
      %p76 = pneg %p75
      %s77 = sadd.s32 %s72, 2
      %s78 = scalar_select %p76, %s77, %s72
      %p79 = scmp.lt.s32.totalorder %s19, 0
      %s80 = ssub.s32 0, %s19
      %s81 = scalar_select %p79, %s80, %s19
      %s82 = sand.u32 %s81, 1
      %s83 = ssub.s32 0, %s82
      %s84 = scalar_select %p79, %s83, %s82
      %p85 = scmp.ne.s32.totalorder %s84, 0
      %p86 = scmp.lt.s32.totalorder %s84, 0
      %p87 = pnand %p86, %p85
      %p88 = pneg %p87
      %s89 = sadd.s32 %s84, 2
      %s90 = scalar_select %p88, %s89, %s84
      %s91 = ssub.s32 %s78, %s90
      %p92 = scmp.eq.s32.totalorder %s91, 0
      %s94 = sadd.s32 %s93, 1
      %s95 = scalar_select %p92, %s93, %s94
      %p98 = pneg %p92
      %p99 = scmp.eq.s32.totalorder %s12, 3
      %p100 = por %p98, %p99
      %p101 = scmp.ne.s32.totalorder %s93, %s96
      %p102 = scmp.eq.s32.totalorder %s12, 0
      %p103 = por %p101, %p102
      %p104 = scmp.ne.s32.totalorder %s93, %s96
      %p105 = scmp.eq.s32.totalorder %s17, 3
      %p106 = por %p104, %p105
      %p107 = scmp.ne.s32.totalorder %s96, %s97
      %p108 = scmp.eq.s32.totalorder %s17, 0
      %p109 = por %p107, %p108
      %p110 = scmp.ne.s32.totalorder %s96, %s97
      %p111 = scmp.eq.s32.totalorder %s18, 3
      %p112 = por %p110, %p111
      %p114 = scmp.ne.s32.totalorder %s97, %s113
      %p115 = scmp.eq.s32.totalorder %s18, 0
      %p116 = por %p114, %p115
      %s117 = ssub.s32 %s12, %s19
      %p118 = scmp.eq.s32.totalorder %s117, 0
      %s120 = sadd.s32 %s119, 1
      %s121 = scalar_select %p118, %s119, %s120
      %p124 = pneg %p118
      %p125 = scmp.eq.s32.totalorder %s12, 3
      %p126 = por %p124, %p125
      %p127 = scmp.ne.s32.totalorder %s119, %s122
      %p128 = scmp.eq.s32.totalorder %s12, 0
      %p129 = por %p127, %p128
      %p130 = scmp.ne.s32.totalorder %s119, %s122
      %p131 = scmp.eq.s32.totalorder %s17, 3
      %p132 = por %p130, %p131
      %p133 = scmp.ne.s32.totalorder %s122, %s123
      %p134 = scmp.eq.s32.totalorder %s17, 0
      %p135 = por %p133, %p134
      %p136 = scmp.ne.s32.totalorder %s122, %s123
      %p137 = scmp.eq.s32.totalorder %s18, 3
      %p138 = por %p136, %p137
      %p140 = scmp.ne.s32.totalorder %s123, %s139
      %p141 = scmp.eq.s32.totalorder %s18, 0
      %p142 = por %p140, %p141
      %p143 = scmp.le.s32.totalorder 1, %s12
      %p144 = scmp.lt.s32.totalorder %s12, 5
      %p145 = pnand %p143, %p144
      %p146 = pneg %p145
      // Predicated region
      $region9: #{tpu_custom_call.1} parent=5 // pred_check
        _
      $region10: #{tpu_custom_call.1} parent=5 // pred_check_branch
        %148 = sbr.rel (%p145) target = $region12
      $region11: #{tpu_custom_call.1} parent=5 // pred_region
        %s149 = ssub.s32 %s12, 1
        // Predicated region
        $region13: #{tpu_custom_call.1} parent=11 // pred_check
          %p150 = pneg %p59
        $region14: #{tpu_custom_call.1} parent=11 // pred_check_branch
          %152 = sbr.rel (%p150) target = $region16
        $region15: #{tpu_custom_call.1} parent=11 // pred_region
          _
        $region16: #{tpu_custom_call.1} parent=11 // pred_fallthru
          _
      $region12: #{tpu_custom_call.1} parent=5 // pred_fallthru
        _
      %p153 = scmp.lt.s32.totalorder %s12, 4
      // Predicated region
      $region17: #{tpu_custom_call.1} parent=5 // pred_check
        %p154 = pneg %p153
      $region18: #{tpu_custom_call.1} parent=5 // pred_check_branch
        %156 = sbr.rel (%p154) target = $region20
      $region19: #{tpu_custom_call.1} parent=5 // pred_region
        // Predicated region
        $region21: #{tpu_custom_call.1} parent=19 // pred_check
          %p157 = pneg %p32
        $region22: #{tpu_custom_call.1} parent=19 // pred_check_branch
          %159 = sbr.rel (%p157) target = $region24
        $region23: #{tpu_custom_call.1} parent=19 // pred_region
          %p160 = scmp.lt.s32.totalorder %s12, 3
          %s161 = scalar_select %p160, %s12, 3
          %s162 = smul.addr %s161, 8
          %s163 = scalar_lea.vmem %s0, %s162
        $region24: #{tpu_custom_call.1} parent=19 // pred_fallthru
          _
        // Predicated region
        $region25: #{tpu_custom_call.1} parent=19 // pred_check
          %p164 = pneg %p103
        $region26: #{tpu_custom_call.1} parent=19 // pred_check_branch
          %166 = sbr.rel (%p164) target = $region28
        $region27: #{tpu_custom_call.1} parent=19 // pred_region
          %p167 = scmp.lt.s32.totalorder %s12, 0
          %s168 = ssub.s32 0, %s12
          %s169 = scalar_select %p167, %s168, %s12
          %s170 = sand.u32 %s169, 1
          %s171 = ssub.s32 0, %s170
          %s172 = scalar_select %p167, %s171, %s170
          %p173 = scmp.ne.s32.totalorder %s172, 0
          %p174 = scmp.lt.s32.totalorder %s172, 0
          %p175 = pnand %p174, %p173
          %p176 = pneg %p175
          %s177 = sadd.s32 %s172, 2
          %s178 = scalar_select %p176, %s177, %s172
          %p179 = scmp.lt.s32.totalorder %s178, 1
          %s180 = scalar_select %p179, %s178, 1
          %s181 = smul.addr %s180, 8
          %s182 = scalar_lea.vmem %s2, %s181
          %p183 = scmp.lt.s32.totalorder %s12, 0
          %s184 = ssub.s32 0, %s12
          %s185 = scalar_select %p183, %s184, %s12
          %s186 = sand.u32 %s185, 1
          %s187 = ssub.s32 0, %s186
          %s188 = scalar_select %p183, %s187, %s186
          %p189 = scmp.ne.s32.totalorder %s188, 0
          %p190 = scmp.lt.s32.totalorder %s188, 0
          %p191 = pnand %p190, %p189
          %p192 = pneg %p191
          %s193 = sadd.s32 %s188, 2
          %s194 = scalar_select %p192, %s193, %s188
        $region28: #{tpu_custom_call.1} parent=19 // pred_fallthru
          _
      $region20: #{tpu_custom_call.1} parent=5 // pred_fallthru
        _
      %p195 = scmp.le.s32.totalorder 1, %s12
      %p196 = scmp.lt.s32.totalorder %s12, 5
      %p197 = pnand %p195, %p196
      %p198 = pneg %p197
      // Predicated region
      $region29: #{tpu_custom_call.1} parent=5 // pred_check
        _
      $region30: #{tpu_custom_call.1} parent=5 // pred_check_branch
        %200 = sbr.rel (%p197) target = $region32
      $region31: #{tpu_custom_call.1} parent=5 // pred_region
        %s201 = ssub.s32 %s12, 1
        %p202 = scmp.lt.s32.totalorder %s17, 3
        %s203 = scalar_select %p202, %s17, 3
        %s204 = smul.addr %s203, 8
        %s205 = scalar_lea.vmem %s0, %s204
        %p206 = pneg %p38
        %p207 = pneg %p35
        %p208 = pneg %p59
        %p209 = pneg %p56
        %p210 = scmp.lt.s32.totalorder %s17, 0
        %s211 = ssub.s32 0, %s17
        %s212 = scalar_select %p210, %s211, %s17
        %s213 = sand.u32 %s212, 1
        %s214 = ssub.s32 0, %s213
        %s215 = scalar_select %p210, %s214, %s213
        %p216 = scmp.ne.s32.totalorder %s215, 0
        %p217 = scmp.lt.s32.totalorder %s215, 0
        %p218 = pnand %p217, %p216
        %p219 = pneg %p218
        %s220 = sadd.s32 %s215, 2
        %s221 = scalar_select %p219, %s220, %s215
        %p222 = scmp.lt.s32.totalorder %s221, 1
        %s223 = scalar_select %p222, %s221, 1
        %s224 = smul.addr %s223, 8
        %s225 = scalar_lea.vmem %s2, %s224
        %p226 = pneg %p109
        %p227 = pneg %p106
        %p228 = pneg %p135
        %p229 = pneg %p132
        %s230 = sand.u32 %s122, 1
        %s231 = scalar_lea.sflag [#allocation3], %s230
        %s232 = sand.u32 %s122, 1
        %s233 = smul.addr %s232, 8
        %s234 = scalar_lea.vmem [#allocation2], %s233
        %p235 = scmp.lt.s32.totalorder %s17, 3
        %s236 = scalar_select %p235, %s17, 3
        %s237 = smul.addr %s236, 8
        %s238 = scalar_lea.vmem %s0, %s237
        %p239 = scmp.lt.s32.totalorder %s17, 0
        %s240 = ssub.s32 0, %s17
        %s241 = scalar_select %p239, %s240, %s17
        %s242 = sand.u32 %s241, 1
        %s243 = ssub.s32 0, %s242
        %s244 = scalar_select %p239, %s243, %s242
        %p245 = scmp.ne.s32.totalorder %s244, 0
        %p246 = scmp.lt.s32.totalorder %s244, 0
        %p247 = pnand %p246, %p245
        %p248 = pneg %p247
        %s249 = sadd.s32 %s244, 2
        %s250 = scalar_select %p248, %s249, %s244
        %p251 = scmp.lt.s32.totalorder %s250, 1
        %s252 = scalar_select %p251, %s250, 1
        %s253 = smul.addr %s252, 8
        %s254 = scalar_lea.vmem %s2, %s253
        %p255 = scmp.lt.s32.totalorder %s17, 0
        %s256 = ssub.s32 0, %s17
        %s257 = scalar_select %p255, %s256, %s17
        %s258 = sand.u32 %s257, 1
        %s259 = ssub.s32 0, %s258
        %s260 = scalar_select %p255, %s259, %s258
        %p261 = scmp.ne.s32.totalorder %s260, 0
        %p262 = scmp.lt.s32.totalorder %s260, 0
        %p263 = pnand %p262, %p261
        %p264 = pneg %p263
        %s265 = sadd.s32 %s260, 2
        %s266 = scalar_select %p264, %s265, %s260
        %v267 = vld [vmem:[%s238] sm:$0xff]
        %v268 = vld [vmem:[%s1] sm:$0xff]
        %v269 = vld [vmem:[%s254] sm:$0xff]
        %vm270 = vcmask 64512
        %v272 = vsel %vm270, %v267, 0
        %274 = vmatprep.subr.mxu0 0.0
        %v275 = vand.u32 %v268, 4294901760
        %276 = vmatpush1.msra.mxu0 %v275
        %277 = vmatprep.subr.mxu0 0.0
        %278 = vmatpush1.msra.mxu0 0.0
        %279 = vmatprep.subr.mxu0 0.0
        %280 = vmatpush1.msra.mxu0 0.0
        %281 = vmatprep.subr.mxu0 0.0
        %282 = vmatpush1.msra.mxu0 0.0
        %283 = vmatprep.subr.mxu0 0.0
        %284 = vmatpush1.msra.mxu0 0.0
        %285 = vmatprep.subr.mxu0 0.0
        %286 = vmatpush1.msra.mxu0 0.0
        %287 = vmatprep.subr.mxu0 0.0
        %288 = vmatpush1.msra.mxu0 0.0
        %289 = vmatprep.subr.mxu0 0.0
        %290 = vmatpush1.msra.mxu0 0.0
        %291 = vmatprep.subr.mxu0 0.0
        %292 = vmatpush1.msra.mxu0 0.0
        %293 = vmatprep.subr.mxu0 0.0
        %294 = vmatpush1.msra.mxu0 0.0
        %295 = vmatprep.subr.mxu0 0.0
        %296 = vmatpush1.msra.mxu0 0.0
        %297 = vmatprep.subr.mxu0 0.0
        %298 = vmatpush1.msra.mxu0 0.0
        %299 = vmatprep.subr.mxu0 0.0
        %300 = vmatpush1.msra.mxu0 0.0
        %301 = vmatprep.subr.mxu0 0.0
        %302 = vmatpush1.msra.mxu0 0.0
        %303 = vmatprep.subr.mxu0 0.0
        %304 = vmatpush1.msra.mxu0 0.0
        %305 = vmatprep.subr.mxu0 0.0
        %306 = vmatpush1.msra.mxu0 0.0
        %307 = vmatprep.subr.mxu0 0.0
        %308 = vmatpush1.msra.mxu0 0.0
        %309 = vmatprep.subr.mxu0 0.0
        %310 = vmatpush1.msra.mxu0 0.0
        %311 = vmatprep.subr.mxu0 0.0
        %312 = vmatpush1.msra.mxu0 0.0
        %313 = vmatprep.subr.mxu0 0.0
        %314 = vmatpush1.msra.mxu0 0.0
        %315 = vmatprep.subr.mxu0 0.0
        %316 = vmatpush1.msra.mxu0 0.0
        %317 = vmatprep.subr.mxu0 0.0
        %318 = vmatpush1.msra.mxu0 0.0
        %319 = vmatprep.subr.mxu0 0.0
        %320 = vmatpush1.msra.mxu0 0.0
        %321 = vmatprep.subr.mxu0 0.0
        %322 = vmatpush1.msra.mxu0 0.0
        %323 = vmatprep.subr.mxu0 0.0
        %324 = vmatpush1.msra.mxu0 0.0
        %325 = vmatprep.subr.mxu0 0.0
        %326 = vmatpush1.msra.mxu0 0.0
        %327 = vmatprep.subr.mxu0 0.0
        %328 = vmatpush1.msra.mxu0 0.0
        %329 = vmatprep.subr.mxu0 0.0
        %330 = vmatpush1.msra.mxu0 0.0
        %331 = vmatprep.subr.mxu0 0.0
        %332 = vmatpush1.msra.mxu0 0.0
        %333 = vmatprep.subr.mxu0 0.0
        %334 = vmatpush1.msra.mxu0 0.0
        %335 = vmatprep.subr.mxu0 0.0
        %336 = vmatpush1.msra.mxu0 0.0
        %337 = vmatprep.subr.mxu0 0.0
        %338 = vmatpush1.msra.mxu0 0.0
        %339 = vmatprep.mubr.f32.mxu0 0.0
        %v340 = vand.u32 %v272, 4294901760
        %v341 = vsub.f32 %v272, %v340
        %v342 = vand.u32 %v341, 4294901760
        %v343 = vsub.f32 %v341, %v342
        %v344 = vand.u32 %v343, 4294901760
        %345 = vmatmul.mubr.f32.gmra.mrb[0].mxu0 %v344
        %v346 = vpop.f32.mrb[0].mxu0
        %v347 = vadd.f32 %v269, %v346
        %v348 = vpop.f32.mrb[0].mxu0
        %349 = vdwg.mxu0
        %350 = vmatprep.subr.mxu0 0.0
        %v351 = vand.u32 %v268, 4294901760
        %v352 = vsub.f32 %v268, %v351
        %v353 = vand.u32 %v352, 4294901760
        %v354 = vsub.f32 %v352, %v353
        %v355 = vand.u32 %v354, 4294901760
        %356 = vmatpush1.msra.mxu0 %v355
        %357 = vmatprep.subr.mxu0 0.0
        %358 = vmatpush1.msra.mxu0 0.0
        %359 = vmatprep.subr.mxu0 0.0
        %360 = vmatpush1.msra.mxu0 0.0
        %361 = vmatprep.subr.mxu0 0.0
        %362 = vmatpush1.msra.mxu0 0.0
        %363 = vmatprep.subr.mxu0 0.0
        %364 = vmatpush1.msra.mxu0 0.0
        %365 = vmatprep.subr.mxu0 0.0
        %366 = vmatpush1.msra.mxu0 0.0
        %367 = vmatprep.subr.mxu0 0.0
        %368 = vmatpush1.msra.mxu0 0.0
        %369 = vmatprep.subr.mxu0 0.0
        %370 = vmatpush1.msra.mxu0 0.0
        %371 = vmatprep.subr.mxu0 0.0
        %372 = vmatpush1.msra.mxu0 0.0
        %373 = vmatprep.subr.mxu0 0.0
        %374 = vmatpush1.msra.mxu0 0.0
        %375 = vmatprep.subr.mxu0 0.0
        %376 = vmatpush1.msra.mxu0 0.0
        %377 = vmatprep.subr.mxu0 0.0
        %378 = vmatpush1.msra.mxu0 0.0
        %379 = vmatprep.subr.mxu0 0.0
        %380 = vmatpush1.msra.mxu0 0.0
        %381 = vmatprep.subr.mxu0 0.0
        %382 = vmatpush1.msra.mxu0 0.0
        %383 = vmatprep.subr.mxu0 0.0
        %384 = vmatpush1.msra.mxu0 0.0
        %385 = vmatprep.subr.mxu0 0.0
        %386 = vmatpush1.msra.mxu0 0.0
        %387 = vmatprep.subr.mxu0 0.0
        %388 = vmatpush1.msra.mxu0 0.0
        %389 = vmatprep.subr.mxu0 0.0
        %390 = vmatpush1.msra.mxu0 0.0
        %391 = vmatprep.subr.mxu0 0.0
        %392 = vmatpush1.msra.mxu0 0.0
        %393 = vmatprep.subr.mxu0 0.0
        %394 = vmatpush1.msra.mxu0 0.0
        %395 = vmatprep.subr.mxu0 0.0
        %396 = vmatpush1.msra.mxu0 0.0
        %397 = vmatprep.subr.mxu0 0.0
        %398 = vmatpush1.msra.mxu0 0.0
        %399 = vmatprep.subr.mxu0 0.0
        %400 = vmatpush1.msra.mxu0 0.0
        %401 = vmatprep.subr.mxu0 0.0
        %402 = vmatpush1.msra.mxu0 0.0
        %403 = vmatprep.subr.mxu0 0.0
        %404 = vmatpush1.msra.mxu0 0.0
        %405 = vmatprep.subr.mxu0 0.0
        %406 = vmatpush1.msra.mxu0 0.0
        %407 = vmatprep.subr.mxu0 0.0
        %408 = vmatpush1.msra.mxu0 0.0
        %409 = vmatprep.subr.mxu0 0.0
        %410 = vmatpush1.msra.mxu0 0.0
        %411 = vmatprep.subr.mxu0 0.0
        %412 = vmatpush1.msra.mxu0 0.0
        %413 = vmatprep.subr.mxu0 0.0
        %414 = vmatpush1.msra.mxu0 0.0
        %415 = vmatprep.subr.mxu0 0.0
        %416 = vmatpush1.msra.mxu0 0.0
        %417 = vmatprep.subr.mxu0 0.0
        %418 = vmatpush1.msra.mxu0 0.0
        %419 = vmatprep.mubr.f32.mxu0 0.0
        %v420 = vand.u32 %v272, 4294901760
        %421 = vmatmul.mubr.f32.gmra.mrb[0].mxu0 %v420
        %v422 = vpop.f32.mrb[0].mxu0
        %v423 = vadd.f32 %v347, %v422
        %v424 = vpop.f32.mrb[0].mxu0
        %425 = vdwg.mxu0
        %426 = vmatprep.subr.mxu0 0.0
        %v427 = vand.u32 %v268, 4294901760
        %v428 = vsub.f32 %v268, %v427
        %429 = vmatpush1.msra.mxu0 %v428
        %430 = vmatprep.subr.mxu0 0.0
        %431 = vmatpush1.msra.mxu0 0.0
        %432 = vmatprep.subr.mxu0 0.0
        %433 = vmatpush1.msra.mxu0 0.0
        %434 = vmatprep.subr.mxu0 0.0
        %435 = vmatpush1.msra.mxu0 0.0
        %436 = vmatprep.subr.mxu0 0.0
        %437 = vmatpush1.msra.mxu0 0.0
        %438 = vmatprep.subr.mxu0 0.0
        %439 = vmatpush1.msra.mxu0 0.0
        %440 = vmatprep.subr.mxu0 0.0
        %441 = vmatpush1.msra.mxu0 0.0
        %442 = vmatprep.subr.mxu0 0.0
        %443 = vmatpush1.msra.mxu0 0.0
        %444 = vmatprep.subr.mxu0 0.0
        %445 = vmatpush1.msra.mxu0 0.0
        %446 = vmatprep.subr.mxu0 0.0
        %447 = vmatpush1.msra.mxu0 0.0
        %448 = vmatprep.subr.mxu0 0.0
        %449 = vmatpush1.msra.mxu0 0.0
        %450 = vmatprep.subr.mxu0 0.0
        %451 = vmatpush1.msra.mxu0 0.0
        %452 = vmatprep.subr.mxu0 0.0
        %453 = vmatpush1.msra.mxu0 0.0
        %454 = vmatprep.subr.mxu0 0.0
        %455 = vmatpush1.msra.mxu0 0.0
        %456 = vmatprep.subr.mxu0 0.0
        %457 = vmatpush1.msra.mxu0 0.0
        %458 = vmatprep.subr.mxu0 0.0
        %459 = vmatpush1.msra.mxu0 0.0
        %460 = vmatprep.subr.mxu0 0.0
        %461 = vmatpush1.msra.mxu0 0.0
        %462 = vmatprep.subr.mxu0 0.0
        %463 = vmatpush1.msra.mxu0 0.0
        %464 = vmatprep.subr.mxu0 0.0
        %465 = vmatpush1.msra.mxu0 0.0
        %466 = vmatprep.subr.mxu0 0.0
        %467 = vmatpush1.msra.mxu0 0.0
        %468 = vmatprep.subr.mxu0 0.0
        %469 = vmatpush1.msra.mxu0 0.0
        %470 = vmatprep.subr.mxu0 0.0
        %471 = vmatpush1.msra.mxu0 0.0
        %472 = vmatprep.subr.mxu0 0.0
        %473 = vmatpush1.msra.mxu0 0.0
        %474 = vmatprep.subr.mxu0 0.0
        %475 = vmatpush1.msra.mxu0 0.0
        %476 = vmatprep.subr.mxu0 0.0
        %477 = vmatpush1.msra.mxu0 0.0
        %478 = vmatprep.subr.mxu0 0.0
        %479 = vmatpush1.msra.mxu0 0.0
        %480 = vmatprep.subr.mxu0 0.0
        %481 = vmatpush1.msra.mxu0 0.0
        %482 = vmatprep.subr.mxu0 0.0
        %483 = vmatpush1.msra.mxu0 0.0
        %484 = vmatprep.subr.mxu0 0.0
        %485 = vmatpush1.msra.mxu0 0.0
        %486 = vmatprep.subr.mxu0 0.0
        %487 = vmatpush1.msra.mxu0 0.0
        %488 = vmatprep.subr.mxu0 0.0
        %489 = vmatpush1.msra.mxu0 0.0
        %490 = vmatprep.subr.mxu0 0.0
        %491 = vmatpush1.msra.mxu0 0.0
        %492 = vmatprep.mubr.f32.mxu0 0.0
        %v493 = vand.u32 %v272, 4294901760
        %v494 = vsub.f32 %v272, %v493
        %495 = vmatmul.mubr.f32.gmra.mrb[0].mxu0 %v494
        %v496 = vpop.f32.mrb[0].mxu0
        %v497 = vadd.f32 %v423, %v496
        %v498 = vpop.f32.mrb[0].mxu0
        %499 = vdwg.mxu0
        %500 = vmatprep.subr.mxu0 0.0
        %v501 = vand.u32 %v268, 4294901760
        %502 = vmatpush1.msra.mxu0 %v501
        %503 = vmatprep.subr.mxu0 0.0
        %504 = vmatpush1.msra.mxu0 0.0
        %505 = vmatprep.subr.mxu0 0.0
        %506 = vmatpush1.msra.mxu0 0.0
        %507 = vmatprep.subr.mxu0 0.0
        %508 = vmatpush1.msra.mxu0 0.0
        %509 = vmatprep.subr.mxu0 0.0
        %510 = vmatpush1.msra.mxu0 0.0
        %511 = vmatprep.subr.mxu0 0.0
        %512 = vmatpush1.msra.mxu0 0.0
        %513 = vmatprep.subr.mxu0 0.0
        %514 = vmatpush1.msra.mxu0 0.0
        %515 = vmatprep.subr.mxu0 0.0
        %516 = vmatpush1.msra.mxu0 0.0
        %517 = vmatprep.subr.mxu0 0.0
        %518 = vmatpush1.msra.mxu0 0.0
        %519 = vmatprep.subr.mxu0 0.0
        %520 = vmatpush1.msra.mxu0 0.0
        %521 = vmatprep.subr.mxu0 0.0
        %522 = vmatpush1.msra.mxu0 0.0
        %523 = vmatprep.subr.mxu0 0.0
        %524 = vmatpush1.msra.mxu0 0.0
        %525 = vmatprep.subr.mxu0 0.0
        %526 = vmatpush1.msra.mxu0 0.0
        %527 = vmatprep.subr.mxu0 0.0
        %528 = vmatpush1.msra.mxu0 0.0
        %529 = vmatprep.subr.mxu0 0.0
        %530 = vmatpush1.msra.mxu0 0.0
        %531 = vmatprep.subr.mxu0 0.0
        %532 = vmatpush1.msra.mxu0 0.0
        %533 = vmatprep.subr.mxu0 0.0
        %534 = vmatpush1.msra.mxu0 0.0
        %535 = vmatprep.subr.mxu0 0.0
        %536 = vmatpush1.msra.mxu0 0.0
        %537 = vmatprep.subr.mxu0 0.0
        %538 = vmatpush1.msra.mxu0 0.0
        %539 = vmatprep.subr.mxu0 0.0
        %540 = vmatpush1.msra.mxu0 0.0
        %541 = vmatprep.subr.mxu0 0.0
        %542 = vmatpush1.msra.mxu0 0.0
        %543 = vmatprep.subr.mxu0 0.0
        %544 = vmatpush1.msra.mxu0 0.0
        %545 = vmatprep.subr.mxu0 0.0
        %546 = vmatpush1.msra.mxu0 0.0
        %547 = vmatprep.subr.mxu0 0.0
        %548 = vmatpush1.msra.mxu0 0.0
        %549 = vmatprep.subr.mxu0 0.0
        %550 = vmatpush1.msra.mxu0 0.0
        %551 = vmatprep.subr.mxu0 0.0
        %552 = vmatpush1.msra.mxu0 0.0
        %553 = vmatprep.subr.mxu0 0.0
        %554 = vmatpush1.msra.mxu0 0.0
        %555 = vmatprep.subr.mxu0 0.0
        %556 = vmatpush1.msra.mxu0 0.0
        %557 = vmatprep.subr.mxu0 0.0
        %558 = vmatpush1.msra.mxu0 0.0
        %559 = vmatprep.subr.mxu0 0.0
        %560 = vmatpush1.msra.mxu0 0.0
        %561 = vmatprep.subr.mxu0 0.0
        %562 = vmatpush1.msra.mxu0 0.0
        %563 = vmatprep.subr.mxu0 0.0
        %564 = vmatpush1.msra.mxu0 0.0
        %565 = vmatprep.mubr.f32.mxu0 0.0
        %v566 = vand.u32 %v272, 4294901760
        %v567 = vsub.f32 %v272, %v566
        %v568 = vand.u32 %v567, 4294901760
        %569 = vmatmul.mubr.f32.gmra.mrb[0].mxu0 %v568
        %v570 = vpop.f32.mrb[0].mxu0
        %v571 = vadd.f32 %v497, %v570
        %v572 = vpop.f32.mrb[0].mxu0
        %573 = vdwg.mxu0
        %574 = vmatprep.subr.mxu0 0.0
        %v575 = vand.u32 %v268, 4294901760
        %v576 = vsub.f32 %v268, %v575
        %v577 = vand.u32 %v576, 4294901760
        %578 = vmatpush1.msra.mxu0 %v577
        %579 = vmatprep.subr.mxu0 0.0
        %580 = vmatpush1.msra.mxu0 0.0
        %581 = vmatprep.subr.mxu0 0.0
        %582 = vmatpush1.msra.mxu0 0.0
        %583 = vmatprep.subr.mxu0 0.0
        %584 = vmatpush1.msra.mxu0 0.0
        %585 = vmatprep.subr.mxu0 0.0
        %586 = vmatpush1.msra.mxu0 0.0
        %587 = vmatprep.subr.mxu0 0.0
        %588 = vmatpush1.msra.mxu0 0.0
        %589 = vmatprep.subr.mxu0 0.0
        %590 = vmatpush1.msra.mxu0 0.0
        %591 = vmatprep.subr.mxu0 0.0
        %592 = vmatpush1.msra.mxu0 0.0
        %593 = vmatprep.subr.mxu0 0.0
        %594 = vmatpush1.msra.mxu0 0.0
        %595 = vmatprep.subr.mxu0 0.0
        %596 = vmatpush1.msra.mxu0 0.0
        %597 = vmatprep.subr.mxu0 0.0
        %598 = vmatpush1.msra.mxu0 0.0
        %599 = vmatprep.subr.mxu0 0.0
        %600 = vmatpush1.msra.mxu0 0.0
        %601 = vmatprep.subr.mxu0 0.0
        %602 = vmatpush1.msra.mxu0 0.0
        %603 = vmatprep.subr.mxu0 0.0
        %604 = vmatpush1.msra.mxu0 0.0
        %605 = vmatprep.subr.mxu0 0.0
        %606 = vmatpush1.msra.mxu0 0.0
        %607 = vmatprep.subr.mxu0 0.0
        %608 = vmatpush1.msra.mxu0 0.0
        %609 = vmatprep.subr.mxu0 0.0
        %610 = vmatpush1.msra.mxu0 0.0
        %611 = vmatprep.subr.mxu0 0.0
        %612 = vmatpush1.msra.mxu0 0.0
        %613 = vmatprep.subr.mxu0 0.0
        %614 = vmatpush1.msra.mxu0 0.0
        %615 = vmatprep.subr.mxu0 0.0
        %616 = vmatpush1.msra.mxu0 0.0
        %617 = vmatprep.subr.mxu0 0.0
        %618 = vmatpush1.msra.mxu0 0.0
        %619 = vmatprep.subr.mxu0 0.0
        %620 = vmatpush1.msra.mxu0 0.0
        %621 = vmatprep.subr.mxu0 0.0
        %622 = vmatpush1.msra.mxu0 0.0
        %623 = vmatprep.subr.mxu0 0.0
        %624 = vmatpush1.msra.mxu0 0.0
        %625 = vmatprep.subr.mxu0 0.0
        %626 = vmatpush1.msra.mxu0 0.0
        %627 = vmatprep.subr.mxu0 0.0
        %628 = vmatpush1.msra.mxu0 0.0
        %629 = vmatprep.subr.mxu0 0.0
        %630 = vmatpush1.msra.mxu0 0.0
        %631 = vmatprep.subr.mxu0 0.0
        %632 = vmatpush1.msra.mxu0 0.0
        %633 = vmatprep.subr.mxu0 0.0
        %634 = vmatpush1.msra.mxu0 0.0
        %635 = vmatprep.subr.mxu0 0.0
        %636 = vmatpush1.msra.mxu0 0.0
        %637 = vmatprep.subr.mxu0 0.0
        %638 = vmatpush1.msra.mxu0 0.0
        %639 = vmatprep.subr.mxu0 0.0
        %640 = vmatpush1.msra.mxu0 0.0
        %641 = vmatprep.mubr.f32.mxu0 0.0
        %v642 = vand.u32 %v272, 4294901760
        %643 = vmatmul.mubr.f32.gmra.mrb[0].mxu0 %v642
        %v644 = vpop.f32.mrb[0].mxu0
        %v645 = vadd.f32 %v571, %v644
        %v646 = vpop.f32.mrb[0].mxu0
        %647 = vdwg.mxu0
        %648 = vmatprep.subr.mxu0 0.0
        %v649 = vand.u32 %v268, 4294901760
        %650 = vmatpush1.msra.mxu0 %v649
        %651 = vmatprep.subr.mxu0 0.0
        %652 = vmatpush1.msra.mxu0 0.0
        %653 = vmatprep.subr.mxu0 0.0
        %654 = vmatpush1.msra.mxu0 0.0
        %655 = vmatprep.subr.mxu0 0.0
        %656 = vmatpush1.msra.mxu0 0.0
        %657 = vmatprep.subr.mxu0 0.0
        %658 = vmatpush1.msra.mxu0 0.0
        %659 = vmatprep.subr.mxu0 0.0
        %660 = vmatpush1.msra.mxu0 0.0
        %661 = vmatprep.subr.mxu0 0.0
        %662 = vmatpush1.msra.mxu0 0.0
        %663 = vmatprep.subr.mxu0 0.0
        %664 = vmatpush1.msra.mxu0 0.0
        %665 = vmatprep.subr.mxu0 0.0
        %666 = vmatpush1.msra.mxu0 0.0
        %667 = vmatprep.subr.mxu0 0.0
        %668 = vmatpush1.msra.mxu0 0.0
        %669 = vmatprep.subr.mxu0 0.0
        %670 = vmatpush1.msra.mxu0 0.0
        %671 = vmatprep.subr.mxu0 0.0
        %672 = vmatpush1.msra.mxu0 0.0
        %673 = vmatprep.subr.mxu0 0.0
        %674 = vmatpush1.msra.mxu0 0.0
        %675 = vmatprep.subr.mxu0 0.0
        %676 = vmatpush1.msra.mxu0 0.0
        %677 = vmatprep.subr.mxu0 0.0
        %678 = vmatpush1.msra.mxu0 0.0
        %679 = vmatprep.subr.mxu0 0.0
        %680 = vmatpush1.msra.mxu0 0.0
        %681 = vmatprep.subr.mxu0 0.0
        %682 = vmatpush1.msra.mxu0 0.0
        %683 = vmatprep.subr.mxu0 0.0
        %684 = vmatpush1.msra.mxu0 0.0
        %685 = vmatprep.subr.mxu0 0.0
        %686 = vmatpush1.msra.mxu0 0.0
        %687 = vmatprep.subr.mxu0 0.0
        %688 = vmatpush1.msra.mxu0 0.0
        %689 = vmatprep.subr.mxu0 0.0
        %690 = vmatpush1.msra.mxu0 0.0
        %691 = vmatprep.subr.mxu0 0.0
        %692 = vmatpush1.msra.mxu0 0.0
        %693 = vmatprep.subr.mxu0 0.0
        %694 = vmatpush1.msra.mxu0 0.0
        %695 = vmatprep.subr.mxu0 0.0
        %696 = vmatpush1.msra.mxu0 0.0
        %697 = vmatprep.subr.mxu0 0.0
        %698 = vmatpush1.msra.mxu0 0.0
        %699 = vmatprep.subr.mxu0 0.0
        %700 = vmatpush1.msra.mxu0 0.0
        %701 = vmatprep.subr.mxu0 0.0
        %702 = vmatpush1.msra.mxu0 0.0
        %703 = vmatprep.subr.mxu0 0.0
        %704 = vmatpush1.msra.mxu0 0.0
        %705 = vmatprep.subr.mxu0 0.0
        %706 = vmatpush1.msra.mxu0 0.0
        %707 = vmatprep.subr.mxu0 0.0
        %708 = vmatpush1.msra.mxu0 0.0
        %709 = vmatprep.subr.mxu0 0.0
        %710 = vmatpush1.msra.mxu0 0.0
        %711 = vmatprep.subr.mxu0 0.0
        %712 = vmatpush1.msra.mxu0 0.0
        %713 = vmatprep.mubr.f32.mxu0 0.0
        %v714 = vand.u32 %v272, 4294901760
        %715 = vmatmul.mubr.f32.gmra.mrb[0].mxu0 %v714
        %v716 = vpop.f32.mrb[0].mxu0
        %v717 = vadd.f32 %v645, %v716
        %v718 = vpop.f32.mrb[0].mxu0
        %719 = vdwg.mxu0
        %vm720 = vcmask 261120
        %721 = vst.msk [vmem:[%s234] sm:$0xff] %vm720, %v717
        %s722 = sand.u32 %s122, 1
        %s723 = scalar_lea.sflag [#allocation3], %s722
        %s724 = sand.u32 %s122, 1
        %s725 = smul.addr %s724, 8
        %s726 = scalar_lea.vmem [#allocation2], %s725
        // Predicated region
        $region33: #{tpu_custom_call.1} parent=31 // pred_check
          %p727 = pneg %p132
        $region34: #{tpu_custom_call.1} parent=31 // pred_check_branch
          %729 = sbr.rel (%p727) target = $region36
        $region35: #{tpu_custom_call.1} parent=31 // pred_region
          %s731 = ssub.s32 128, 128
          %732 = vsyncadd %s723, %s731
          %s733 = smul.addr %s17, 128
          %s734 = scalar_lea.hbm %s3, %s733
          %s736 = sshll.u32 %s726, 4
          %s737 = int_to_ptr.vmem [resolvable:$true] %s736
          %739 = dma.vmem_to_hbm [thread:$0]  %s737, 128, %s734, %s723
        $region36: #{tpu_custom_call.1} parent=31 // pred_fallthru
          _
      $region32: #{tpu_custom_call.1} parent=5 // pred_fallthru
        _
      %p740 = scmp.le.s32.totalorder 2, %s12
      // Predicated region
      $region37: #{tpu_custom_call.1} parent=5 // pred_check
        %p741 = pneg %p740
      $region38: #{tpu_custom_call.1} parent=5 // pred_check_branch
        %743 = sbr.rel (%p741) target = $region40
      $region39: #{tpu_custom_call.1} parent=5 // pred_region
        %s744 = ssub.s32 %s12, 2
        // Predicated region
        $region41: #{tpu_custom_call.1} parent=39 // pred_check
          %p745 = pneg %p138
        $region42: #{tpu_custom_call.1} parent=39 // pred_check_branch
          %747 = sbr.rel (%p745) target = $region44
        $region43: #{tpu_custom_call.1} parent=39 // pred_region
          %s748 = sand.u32 %s123, 1
          %s749 = scalar_lea.sflag [#allocation3], %s748
          %s750 = sand.u32 %s123, 1
          %s751 = smul.addr %s750, 8
          %s752 = scalar_lea.vmem [#allocation2], %s751
          %753 = dma.done %s749, 128
        $region44: #{tpu_custom_call.1} parent=39 // pred_fallthru
          _
      $region40: #{tpu_custom_call.1} parent=5 // pred_fallthru
        _
    $region6: #{tpu_custom_call.1} parent=1 // loop_footer
      %s16 = sadd.s32 1, %s12
    $region7: #{tpu_custom_call.1} parent=1 // loop_footer_branch
      %11 = sbr.rel target = $region3
    $region8: #{tpu_custom_call.1} parent=1 // loop_exit
      _
    %754 = vsyncpa [#allocation3], 1
    %s755 = scalar_lea.sflag [#allocation3], 1
    %756 = vsyncpa %s755, 1

// kernel: tpu_custom_call.1
$region0: #{tpu_custom_call.1}
  #allocation0 [shape = 'u32[]', space=smem, size = 0x4, offset = 0x4, fixed_abs, tag = 'smem constant byte address 0x4 - core index']
  #allocation1 [shape = 'u32[144,128]{1,0:T(1,128)}', space=vmem, size = 0x12000, scoped, tag = 'internal scratch']
  %s0 = inlined_call_operand.vmem [shape: f32[32,8], index: 0, kind: input, shape index: {}]
  %s1 = inlined_call_operand.vmem [shape: f32[8,32], index: 1, kind: input, shape index: {}]
  %s2 = inlined_call_operand.vmem [shape: f32[16,32], index: 2, kind: input, shape index: {}]
  %s3 = inlined_call_operand.hbm [shape: f32[32,32], index: 3, kind: output, shape index: {}]
  %s4 = sld [smem:[#allocation0]]
  $region45: #{tpu_custom_call.1} parent=0
    _
  %s6 = ssub.s32 1, %s4
  %s7 = scalar_select 0, %s6, %s4
  $region1: #{tpu_custom_call.1} parent=0
    #allocation2 [shape = 'u8[8192]{0}', space=vmem, size = 0x2000, scoped, tag = 'output window, operand 0']
    #allocation3 [shape = 's32[2]{0}', space=sflag, size = 0x8, scoped, tag = 'scoped memory for tpu_custom_call.1']
    %8 = vsyncpa [#allocation3], 0
    %s9 = scalar_lea.sflag [#allocation3], 1
    %10 = vsyncpa %s9, 0
    loop: start=0, step=1, limit=6
    $region2: #{tpu_custom_call.1} parent=1 // loop_pre_header
      _
    $region3: #{tpu_custom_call.1} parent=1 // loop_header
      %s12 = sphi 0, %s16
      %p13 = scmp.ge.s32.totalorder %s12, 6
      %s22 = sphi 0, %s24
      %s25 = sphi 0, %s22
      %s26 = sphi 0, %s25
      %s42 = sphi 0, %s26
      %s46 = sphi 0, %s46
      %s48 = sphi 0, %s46
      %s49 = sphi 0, %s48
      %s63 = sphi 0, %s49
      %s93 = sphi 0, %s95
      %s96 = sphi 0, %s93
      %s97 = sphi 0, %s96
      %s113 = sphi 0, %s97
      %s119 = sphi 0, %s121
      %s122 = sphi 0, %s119
      %s123 = sphi 0, %s122
      %s139 = sphi 0, %s123
    $region4: #{tpu_custom_call.1} parent=1 // loop_header_branch
      %15 = sbr.rel (%p13) target = $region8
    $region5: #{tpu_custom_call.1} parent=1 // loop_body
      %s17 = ssub.s32 %s12, 1
      %s18 = ssub.s32 %s12, 2
      %s19 = sadd.s32 %s12, 1
      %s20 = ssub.s32 %s12, %s19
      %p21 = scmp.eq.s32.totalorder %s20, 0
      %s23 = sadd.s32 %s22, 1
      %s24 = scalar_select %p21, %s22, %s23
      %p27 = pneg %p21
      %p28 = scmp.eq.s32.totalorder %s12, 3
      %p29 = por %p27, %p28
      %p30 = scmp.ne.s32.totalorder %s22, %s25
      %p31 = scmp.eq.s32.totalorder %s12, 0
      %p32 = por %p30, %p31
      %p33 = scmp.ne.s32.totalorder %s22, %s25
      %p34 = scmp.eq.s32.totalorder %s17, 3
      %p35 = por %p33, %p34
      %p36 = scmp.ne.s32.totalorder %s25, %s26
      %p37 = scmp.eq.s32.totalorder %s17, 0
      %p38 = por %p36, %p37
      %p39 = scmp.ne.s32.totalorder %s25, %s26
      %p40 = scmp.eq.s32.totalorder %s18, 3
      %p41 = por %p39, %p40
      %p43 = scmp.ne.s32.totalorder %s26, %s42
      %p44 = scmp.eq.s32.totalorder %s18, 0
      %p45 = por %p43, %p44
      %s47 = sadd.s32 %s46, 1
      %p50 = scmp.eq.s32.totalorder %s12, 3
      %p51 = scmp.ne.s32.totalorder %s46, %s48
      %p52 = scmp.eq.s32.totalorder %s12, 0
      %p53 = por %p51, %p52
      %p54 = scmp.ne.s32.totalorder %s46, %s48
      %p55 = scmp.eq.s32.totalorder %s17, 3
      %p56 = por %p54, %p55
      %p57 = scmp.ne.s32.totalorder %s48, %s49
      %p58 = scmp.eq.s32.totalorder %s17, 0
      %p59 = por %p57, %p58
      %p60 = scmp.ne.s32.totalorder %s48, %s49
      %p61 = scmp.eq.s32.totalorder %s18, 3
      %p62 = por %p60, %p61
      %p64 = scmp.ne.s32.totalorder %s49, %s63
      %p65 = scmp.eq.s32.totalorder %s18, 0
      %p66 = por %p64, %p65
      %p67 = scmp.lt.s32.totalorder %s12, 0
      %s68 = ssub.s32 0, %s12
      %s69 = scalar_select %p67, %s68, %s12
      %s70 = sand.u32 %s69, 1
      %s71 = ssub.s32 0, %s70
      %s72 = scalar_select %p67, %s71, %s70
      %p73 = scmp.ne.s32.totalorder %s72, 0
      %p74 = scmp.lt.s32.totalorder %s72, 0
      %p75 = pnand %p74, %p73
      %p76 = pneg %p75
      %s77 = sadd.s32 %s72, 2
      %s78 = scalar_select %p76, %s77, %s72
      %p79 = scmp.lt.s32.totalorder %s19, 0
      %s80 = ssub.s32 0, %s19
      %s81 = scalar_select %p79, %s80, %s19
      %s82 = sand.u32 %s81, 1
      %s83 = ssub.s32 0, %s82
      %s84 = scalar_select %p79, %s83, %s82
      %p85 = scmp.ne.s32.totalorder %s84, 0
      %p86 = scmp.lt.s32.totalorder %s84, 0
      %p87 = pnand %p86, %p85
      %p88 = pneg %p87
      %s89 = sadd.s32 %s84, 2
      %s90 = scalar_select %p88, %s89, %s84
      %s91 = ssub.s32 %s78, %s90
      %p92 = scmp.eq.s32.totalorder %s91, 0
      %s94 = sadd.s32 %s93, 1
      %s95 = scalar_select %p92, %s93, %s94
      %p98 = pneg %p92
      %p99 = scmp.eq.s32.totalorder %s12, 3
      %p100 = por %p98, %p99
      %p101 = scmp.ne.s32.totalorder %s93, %s96
      %p102 = scmp.eq.s32.totalorder %s12, 0
      %p103 = por %p101, %p102
      %p104 = scmp.ne.s32.totalorder %s93, %s96
      %p105 = scmp.eq.s32.totalorder %s17, 3
      %p106 = por %p104, %p105
      %p107 = scmp.ne.s32.totalorder %s96, %s97
      %p108 = scmp.eq.s32.totalorder %s17, 0
      %p109 = por %p107, %p108
      %p110 = scmp.ne.s32.totalorder %s96, %s97
      %p111 = scmp.eq.s32.totalorder %s18, 3
      %p112 = por %p110, %p111
      %p114 = scmp.ne.s32.totalorder %s97, %s113
      %p115 = scmp.eq.s32.totalorder %s18, 0
      %p116 = por %p114, %p115
      %s117 = ssub.s32 %s12, %s19
      %p118 = scmp.eq.s32.totalorder %s117, 0
      %s120 = sadd.s32 %s119, 1
      %s121 = scalar_select %p118, %s119, %s120
      %p124 = pneg %p118
      %p125 = scmp.eq.s32.totalorder %s12, 3
      %p126 = por %p124, %p125
      %p127 = scmp.ne.s32.totalorder %s119, %s122
      %p128 = scmp.eq.s32.totalorder %s12, 0
      %p129 = por %p127, %p128
      %p130 = scmp.ne.s32.totalorder %s119, %s122
      %p131 = scmp.eq.s32.totalorder %s17, 3
      %p132 = por %p130, %p131
      %p133 = scmp.ne.s32.totalorder %s122, %s123
      %p134 = scmp.eq.s32.totalorder %s17, 0
      %p135 = por %p133, %p134
      %p136 = scmp.ne.s32.totalorder %s122, %s123
      %p137 = scmp.eq.s32.totalorder %s18, 3
      %p138 = por %p136, %p137
      %p140 = scmp.ne.s32.totalorder %s123, %s139
      %p141 = scmp.eq.s32.totalorder %s18, 0
      %p142 = por %p140, %p141
      %p143 = scmp.le.s32.totalorder 1, %s12
      %p144 = scmp.lt.s32.totalorder %s12, 5
      %p145 = pnand %p143, %p144
      %p146 = pneg %p145
      // Predicated region
      $region9: #{tpu_custom_call.1} parent=5 // pred_check
        _
      $region10: #{tpu_custom_call.1} parent=5 // pred_check_branch
        %148 = sbr.rel (%p145) target = $region12
      $region11: #{tpu_custom_call.1} parent=5 // pred_region
        %s149 = ssub.s32 %s12, 1
        // Predicated region
        $region13: #{tpu_custom_call.1} parent=11 // pred_check
          %p150 = pneg %p59
        $region14: #{tpu_custom_call.1} parent=11 // pred_check_branch
          %152 = sbr.rel (%p150) target = $region16
        $region15: #{tpu_custom_call.1} parent=11 // pred_region
          _
        $region16: #{tpu_custom_call.1} parent=11 // pred_fallthru
          _
      $region12: #{tpu_custom_call.1} parent=5 // pred_fallthru
        _
      %p153 = scmp.lt.s32.totalorder %s12, 4
      // Predicated region
      $region17: #{tpu_custom_call.1} parent=5 // pred_check
        %p154 = pneg %p153
      $region18: #{tpu_custom_call.1} parent=5 // pred_check_branch
        %156 = sbr.rel (%p154) target = $region20
      $region19: #{tpu_custom_call.1} parent=5 // pred_region
        // Predicated region
        $region21: #{tpu_custom_call.1} parent=19 // pred_check
          %p157 = pneg %p32
        $region22: #{tpu_custom_call.1} parent=19 // pred_check_branch
          %159 = sbr.rel (%p157) target = $region24
        $region23: #{tpu_custom_call.1} parent=19 // pred_region
          %p160 = scmp.lt.s32.totalorder %s12, 3
          %s161 = scalar_select %p160, %s12, 3
          %s162 = smul.addr %s161, 8
          %s163 = scalar_lea.vmem %s0, %s162
        $region24: #{tpu_custom_call.1} parent=19 // pred_fallthru
          _
        // Predicated region
        $region25: #{tpu_custom_call.1} parent=19 // pred_check
          %p164 = pneg %p103
        $region26: #{tpu_custom_call.1} parent=19 // pred_check_branch
          %166 = sbr.rel (%p164) target = $region28
        $region27: #{tpu_custom_call.1} parent=19 // pred_region
          %p167 = scmp.lt.s32.totalorder %s12, 0
          %s168 = ssub.s32 0, %s12
          %s169 = scalar_select %p167, %s168, %s12
          %s170 = sand.u32 %s169, 1
          %s171 = ssub.s32 0, %s170
          %s172 = scalar_select %p167, %s171, %s170
          %p173 = scmp.ne.s32.totalorder %s172, 0
          %p174 = scmp.lt.s32.totalorder %s172, 0
          %p175 = pnand %p174, %p173
          %p176 = pneg %p175
          %s177 = sadd.s32 %s172, 2
          %s178 = scalar_select %p176, %s177, %s172
          %p179 = scmp.lt.s32.totalorder %s178, 1
          %s180 = scalar_select %p179, %s178, 1
          %s181 = smul.addr %s180, 8
          %s182 = scalar_lea.vmem %s2, %s181
          %p183 = scmp.lt.s32.totalorder %s12, 0
          %s184 = ssub.s32 0, %s12
          %s185 = scalar_select %p183, %s184, %s12
          %s186 = sand.u32 %s185, 1
          %s187 = ssub.s32 0, %s186
          %s188 = scalar_select %p183, %s187, %s186
          %p189 = scmp.ne.s32.totalorder %s188, 0
          %p190 = scmp.lt.s32.totalorder %s188, 0
          %p191 = pnand %p190, %p189
          %p192 = pneg %p191
          %s193 = sadd.s32 %s188, 2
          %s194 = scalar_select %p192, %s193, %s188
        $region28: #{tpu_custom_call.1} parent=19 // pred_fallthru
          _
      $region20: #{tpu_custom_call.1} parent=5 // pred_fallthru
        _
      %p195 = scmp.le.s32.totalorder 1, %s12
      %p196 = scmp.lt.s32.totalorder %s12, 5
      %p197 = pnand %p195, %p196
      %p198 = pneg %p197
      // Predicated region
      $region29: #{tpu_custom_call.1} parent=5 // pred_check
        _
      $region30: #{tpu_custom_call.1} parent=5 // pred_check_branch
        %200 = sbr.rel (%p197) target = $region32
      $region31: #{tpu_custom_call.1} parent=5 // pred_region
        %s201 = ssub.s32 %s12, 1
        %p202 = scmp.lt.s32.totalorder %s17, 3
        %s203 = scalar_select %p202, %s17, 3
        %s204 = smul.addr %s203, 8
        %s205 = scalar_lea.vmem %s0, %s204
        %p206 = pneg %p38
        %p207 = pneg %p35
        %p208 = pneg %p59
        %p209 = pneg %p56
        %p210 = scmp.lt.s32.totalorder %s17, 0
        %s211 = ssub.s32 0, %s17
        %s212 = scalar_select %p210, %s211, %s17
        %s213 = sand.u32 %s212, 1
        %s214 = ssub.s32 0, %s213
        %s215 = scalar_select %p210, %s214, %s213
        %p216 = scmp.ne.s32.totalorder %s215, 0
        %p217 = scmp.lt.s32.totalorder %s215, 0
        %p218 = pnand %p217, %p216
        %p219 = pneg %p218
        %s220 = sadd.s32 %s215, 2
        %s221 = scalar_select %p219, %s220, %s215
        %p222 = scmp.lt.s32.totalorder %s221, 1
        %s223 = scalar_select %p222, %s221, 1
        %s224 = smul.addr %s223, 8
        %s225 = scalar_lea.vmem %s2, %s224
        %p226 = pneg %p109
        %p227 = pneg %p106
        %p228 = pneg %p135
        %p229 = pneg %p132
        %s230 = sand.u32 %s122, 1
        %s231 = scalar_lea.sflag [#allocation3], %s230
        %s232 = sand.u32 %s122, 1
        %s233 = smul.addr %s232, 8
        %s234 = scalar_lea.vmem [#allocation2], %s233
        %p235 = scmp.lt.s32.totalorder %s17, 3
        %s236 = scalar_select %p235, %s17, 3
        %s237 = smul.addr %s236, 8
        %s238 = scalar_lea.vmem %s0, %s237
        %p239 = scmp.lt.s32.totalorder %s17, 0
        %s240 = ssub.s32 0, %s17
        %s241 = scalar_select %p239, %s240, %s17
        %s242 = sand.u32 %s241, 1
        %s243 = ssub.s32 0, %s242
        %s244 = scalar_select %p239, %s243, %s242
        %p245 = scmp.ne.s32.totalorder %s244, 0
        %p246 = scmp.lt.s32.totalorder %s244, 0
        %p247 = pnand %p246, %p245
        %p248 = pneg %p247
        %s249 = sadd.s32 %s244, 2
        %s250 = scalar_select %p248, %s249, %s244
        %p251 = scmp.lt.s32.totalorder %s250, 1
        %s252 = scalar_select %p251, %s250, 1
        %s253 = smul.addr %s252, 8
        %s254 = scalar_lea.vmem %s2, %s253
        %p255 = scmp.lt.s32.totalorder %s17, 0
        %s256 = ssub.s32 0, %s17
        %s257 = scalar_select %p255, %s256, %s17
        %s258 = sand.u32 %s257, 1
        %s259 = ssub.s32 0, %s258
        %s260 = scalar_select %p255, %s259, %s258
        %p261 = scmp.ne.s32.totalorder %s260, 0
        %p262 = scmp.lt.s32.totalorder %s260, 0
        %p263 = pnand %p262, %p261
        %p264 = pneg %p263
        %s265 = sadd.s32 %s260, 2
        %s266 = scalar_select %p264, %s265, %s260
        %v267 = vld [vmem:[%s238] sm:$0xff]
        %v268 = vld [vmem:[%s1] sm:$0xff]
        %v269 = vld [vmem:[%s254] sm:$0xff]
        %271 = vset.pattern.permute.xlu0 0
        %272 = vperm.xlu0 %271, %v267
        %v273 = vpop.permute.xlu0 %272
        %v275 = vlaneseq
        %v276 = vshrl.u32 %v275, 7
        %v277 = vsub.s32 0, %v276
        %v278 = vrot.slane %v268, %v277
        %v279 = vmul.f32 %v273, %v278
        %v280 = vadd.f32 %v269, %v279
        %281 = vset.pattern.permute.xlu0 1
        %282 = vperm.xlu0 %281, %v267
        %v283 = vpop.permute.xlu0 %282
        %v285 = vlaneseq
        %v286 = vshrl.u32 %v285, 7
        %v287 = vsub.s32 1, %v286
        %v288 = vrot.slane %v268, %v287
        %v289 = vmul.f32 %v283, %v288
        %v290 = vadd.f32 %v280, %v289
        %291 = vset.pattern.permute.xlu0 2
        %292 = vperm.xlu0 %291, %v267
        %v293 = vpop.permute.xlu0 %292
        %v295 = vlaneseq
        %v296 = vshrl.u32 %v295, 7
        %v297 = vsub.s32 2, %v296
        %v298 = vrot.slane %v268, %v297
        %v299 = vmul.f32 %v293, %v298
        %v300 = vadd.f32 %v290, %v299
        %301 = vset.pattern.permute.xlu0 3
        %302 = vperm.xlu0 %301, %v267
        %v303 = vpop.permute.xlu0 %302
        %v305 = vlaneseq
        %v306 = vshrl.u32 %v305, 7
        %v307 = vsub.s32 3, %v306
        %v308 = vrot.slane %v268, %v307
        %v309 = vmul.f32 %v303, %v308
        %v310 = vadd.f32 %v300, %v309
        %311 = vset.pattern.permute.xlu0 4
        %312 = vperm.xlu0 %311, %v267
        %v313 = vpop.permute.xlu0 %312
        %v315 = vlaneseq
        %v316 = vshrl.u32 %v315, 7
        %v317 = vsub.s32 4, %v316
        %v318 = vrot.slane %v268, %v317
        %v319 = vmul.f32 %v313, %v318
        %v320 = vadd.f32 %v310, %v319
        %321 = vset.pattern.permute.xlu0 5
        %322 = vperm.xlu0 %321, %v267
        %v323 = vpop.permute.xlu0 %322
        %v325 = vlaneseq
        %v326 = vshrl.u32 %v325, 7
        %v327 = vsub.s32 5, %v326
        %v328 = vrot.slane %v268, %v327
        %v329 = vmul.f32 %v323, %v328
        %v330 = vadd.f32 %v320, %v329
        %331 = vset.pattern.permute.xlu0 6
        %332 = vperm.xlu0 %331, %v267
        %v333 = vpop.permute.xlu0 %332
        %v335 = vlaneseq
        %v336 = vshrl.u32 %v335, 7
        %v337 = vsub.s32 6, %v336
        %v338 = vrot.slane %v268, %v337
        %v339 = vmul.f32 %v333, %v338
        %v340 = vadd.f32 %v330, %v339
        %341 = vset.pattern.permute.xlu0 7
        %342 = vperm.xlu0 %341, %v267
        %v343 = vpop.permute.xlu0 %342
        %v345 = vlaneseq
        %v346 = vshrl.u32 %v345, 7
        %v347 = vsub.s32 7, %v346
        %v348 = vrot.slane %v268, %v347
        %v349 = vmul.f32 %v343, %v348
        %v350 = vadd.f32 %v340, %v349
        %vm351 = vcmask 261120
        %352 = vst.msk [vmem:[%s234] sm:$0xff] %vm351, %v350
        %s353 = sand.u32 %s122, 1
        %s354 = scalar_lea.sflag [#allocation3], %s353
        %s355 = sand.u32 %s122, 1
        %s356 = smul.addr %s355, 8
        %s357 = scalar_lea.vmem [#allocation2], %s356
        // Predicated region
        $region33: #{tpu_custom_call.1} parent=31 // pred_check
          %p358 = pneg %p132
        $region34: #{tpu_custom_call.1} parent=31 // pred_check_branch
          %360 = sbr.rel (%p358) target = $region36
        $region35: #{tpu_custom_call.1} parent=31 // pred_region
          %s362 = ssub.s32 128, 128
          %363 = vsyncadd %s354, %s362
          %s364 = smul.addr %s17, 128
          %s365 = scalar_lea.hbm %s3, %s364
          %s367 = sshll.u32 %s357, 4
          %s368 = int_to_ptr.vmem [resolvable:$true] %s367
          %370 = dma.vmem_to_hbm [thread:$0]  %s368, 128, %s365, %s354
        $region36: #{tpu_custom_call.1} parent=31 // pred_fallthru
          _
      $region32: #{tpu_custom_call.1} parent=5 // pred_fallthru
        _
      %p371 = scmp.le.s32.totalorder 2, %s12
      // Predicated region
      $region37: #{tpu_custom_call.1} parent=5 // pred_check
        %p372 = pneg %p371
      $region38: #{tpu_custom_call.1} parent=5 // pred_check_branch
        %374 = sbr.rel (%p372) target = $region40
      $region39: #{tpu_custom_call.1} parent=5 // pred_region
        %s375 = ssub.s32 %s12, 2
        // Predicated region
        $region41: #{tpu_custom_call.1} parent=39 // pred_check
          %p376 = pneg %p138
        $region42: #{tpu_custom_call.1} parent=39 // pred_check_branch
          %378 = sbr.rel (%p376) target = $region44
        $region43: #{tpu_custom_call.1} parent=39 // pred_region
          %s379 = sand.u32 %s123, 1
          %s380 = scalar_lea.sflag [#allocation3], %s379
          %s381 = sand.u32 %s123, 1
          %s382 = smul.addr %s381, 8
          %s383 = scalar_lea.vmem [#allocation2], %s382
          %384 = dma.done %s380, 128
        $region44: #{tpu_custom_call.1} parent=39 // pred_fallthru
          _
      $region40: #{tpu_custom_call.1} parent=5 // pred_fallthru
        _
    $region6: #{tpu_custom_call.1} parent=1 // loop_footer
      %s16 = sadd.s32 1, %s12
    $region7: #{tpu_custom_call.1} parent=1 // loop_footer_branch
      %11 = sbr.rel target = $region3
    $region8: #{tpu_custom_call.1} parent=1 // loop_exit
      _
    %385 = vsyncpa [#allocation3], 1
    %s386 = scalar_lea.sflag [#allocation3], 1
    %387 = vsyncpa %s386, 1

// kernel: tpu_custom_call.1
$region0: #{tpu_custom_call.1}
  #allocation0 [shape = 'u32[]', space=smem, size = 0x4, offset = 0x4, fixed_abs, tag = 'smem constant byte address 0x4 - core index']
  #allocation1 [shape = 'u32[144,128]{1,0:T(1,128)}', space=vmem, size = 0x12000, scoped, tag = 'internal scratch']
  %s0 = inlined_call_operand.vmem [shape: f32[32,8], index: 0, kind: input, shape index: {}]
  %s1 = inlined_call_operand.vmem [shape: f32[8,32], index: 1, kind: input, shape index: {}]
  %s2 = inlined_call_operand.vmem [shape: f32[16,32], index: 2, kind: input, shape index: {}]
  %s3 = inlined_call_operand.hbm [shape: f32[32,32], index: 3, kind: output, shape index: {}]
  %s4 = sld [smem:[#allocation0]]
  $region45: #{tpu_custom_call.1} parent=0
    _
  %s6 = ssub.s32 1, %s4
  %s7 = scalar_select 0, %s6, %s4
  $region1: #{tpu_custom_call.1} parent=0
    #allocation2 [shape = 'u8[8192]{0}', space=vmem, size = 0x2000, scoped, tag = 'output window, operand 0']
    #allocation3 [shape = 's32[2]{0}', space=sflag, size = 0x8, scoped, tag = 'scoped memory for tpu_custom_call.1']
    %8 = vsyncpa [#allocation3], 0
    %s9 = scalar_lea.sflag [#allocation3], 1
    %10 = vsyncpa %s9, 0
    loop: start=0, step=1, limit=6
    $region2: #{tpu_custom_call.1} parent=1 // loop_pre_header
      _
    $region3: #{tpu_custom_call.1} parent=1 // loop_header
      %s12 = sphi 0, %s16
      %p13 = scmp.ge.s32.totalorder %s12, 6
      %s22 = sphi 0, %s24
      %s25 = sphi 0, %s22
      %s26 = sphi 0, %s25
      %s42 = sphi 0, %s26
      %s46 = sphi 0, %s46
      %s48 = sphi 0, %s46
      %s49 = sphi 0, %s48
      %s63 = sphi 0, %s49
      %s93 = sphi 0, %s95
      %s96 = sphi 0, %s93
      %s97 = sphi 0, %s96
      %s113 = sphi 0, %s97
      %s119 = sphi 0, %s121
      %s122 = sphi 0, %s119
      %s123 = sphi 0, %s122
      %s139 = sphi 0, %s123
    $region4: #{tpu_custom_call.1} parent=1 // loop_header_branch
      %15 = sbr.rel (%p13) target = $region8
    $region5: #{tpu_custom_call.1} parent=1 // loop_body
      %s17 = ssub.s32 %s12, 1
      %s18 = ssub.s32 %s12, 2
      %s19 = sadd.s32 %s12, 1
      %s20 = ssub.s32 %s12, %s19
      %p21 = scmp.eq.s32.totalorder %s20, 0
      %s23 = sadd.s32 %s22, 1
      %s24 = scalar_select %p21, %s22, %s23
      %p27 = pneg %p21
      %p28 = scmp.eq.s32.totalorder %s12, 3
      %p29 = por %p27, %p28
      %p30 = scmp.ne.s32.totalorder %s22, %s25
      %p31 = scmp.eq.s32.totalorder %s12, 0
      %p32 = por %p30, %p31
      %p33 = scmp.ne.s32.totalorder %s22, %s25
      %p34 = scmp.eq.s32.totalorder %s17, 3
      %p35 = por %p33, %p34
      %p36 = scmp.ne.s32.totalorder %s25, %s26
      %p37 = scmp.eq.s32.totalorder %s17, 0
      %p38 = por %p36, %p37
      %p39 = scmp.ne.s32.totalorder %s25, %s26
      %p40 = scmp.eq.s32.totalorder %s18, 3
      %p41 = por %p39, %p40
      %p43 = scmp.ne.s32.totalorder %s26, %s42
      %p44 = scmp.eq.s32.totalorder %s18, 0
      %p45 = por %p43, %p44
      %s47 = sadd.s32 %s46, 1
      %p50 = scmp.eq.s32.totalorder %s12, 3
      %p51 = scmp.ne.s32.totalorder %s46, %s48
      %p52 = scmp.eq.s32.totalorder %s12, 0
      %p53 = por %p51, %p52
      %p54 = scmp.ne.s32.totalorder %s46, %s48
      %p55 = scmp.eq.s32.totalorder %s17, 3
      %p56 = por %p54, %p55
      %p57 = scmp.ne.s32.totalorder %s48, %s49
      %p58 = scmp.eq.s32.totalorder %s17, 0
      %p59 = por %p57, %p58
      %p60 = scmp.ne.s32.totalorder %s48, %s49
      %p61 = scmp.eq.s32.totalorder %s18, 3
      %p62 = por %p60, %p61
      %p64 = scmp.ne.s32.totalorder %s49, %s63
      %p65 = scmp.eq.s32.totalorder %s18, 0
      %p66 = por %p64, %p65
      %p67 = scmp.lt.s32.totalorder %s12, 0
      %s68 = ssub.s32 0, %s12
      %s69 = scalar_select %p67, %s68, %s12
      %s70 = sand.u32 %s69, 1
      %s71 = ssub.s32 0, %s70
      %s72 = scalar_select %p67, %s71, %s70
      %p73 = scmp.ne.s32.totalorder %s72, 0
      %p74 = scmp.lt.s32.totalorder %s72, 0
      %p75 = pnand %p74, %p73
      %p76 = pneg %p75
      %s77 = sadd.s32 %s72, 2
      %s78 = scalar_select %p76, %s77, %s72
      %p79 = scmp.lt.s32.totalorder %s19, 0
      %s80 = ssub.s32 0, %s19
      %s81 = scalar_select %p79, %s80, %s19
      %s82 = sand.u32 %s81, 1
      %s83 = ssub.s32 0, %s82
      %s84 = scalar_select %p79, %s83, %s82
      %p85 = scmp.ne.s32.totalorder %s84, 0
      %p86 = scmp.lt.s32.totalorder %s84, 0
      %p87 = pnand %p86, %p85
      %p88 = pneg %p87
      %s89 = sadd.s32 %s84, 2
      %s90 = scalar_select %p88, %s89, %s84
      %s91 = ssub.s32 %s78, %s90
      %p92 = scmp.eq.s32.totalorder %s91, 0
      %s94 = sadd.s32 %s93, 1
      %s95 = scalar_select %p92, %s93, %s94
      %p98 = pneg %p92
      %p99 = scmp.eq.s32.totalorder %s12, 3
      %p100 = por %p98, %p99
      %p101 = scmp.ne.s32.totalorder %s93, %s96
      %p102 = scmp.eq.s32.totalorder %s12, 0
      %p103 = por %p101, %p102
      %p104 = scmp.ne.s32.totalorder %s93, %s96
      %p105 = scmp.eq.s32.totalorder %s17, 3
      %p106 = por %p104, %p105
      %p107 = scmp.ne.s32.totalorder %s96, %s97
      %p108 = scmp.eq.s32.totalorder %s17, 0
      %p109 = por %p107, %p108
      %p110 = scmp.ne.s32.totalorder %s96, %s97
      %p111 = scmp.eq.s32.totalorder %s18, 3
      %p112 = por %p110, %p111
      %p114 = scmp.ne.s32.totalorder %s97, %s113
      %p115 = scmp.eq.s32.totalorder %s18, 0
      %p116 = por %p114, %p115
      %s117 = ssub.s32 %s12, %s19
      %p118 = scmp.eq.s32.totalorder %s117, 0
      %s120 = sadd.s32 %s119, 1
      %s121 = scalar_select %p118, %s119, %s120
      %p124 = pneg %p118
      %p125 = scmp.eq.s32.totalorder %s12, 3
      %p126 = por %p124, %p125
      %p127 = scmp.ne.s32.totalorder %s119, %s122
      %p128 = scmp.eq.s32.totalorder %s12, 0
      %p129 = por %p127, %p128
      %p130 = scmp.ne.s32.totalorder %s119, %s122
      %p131 = scmp.eq.s32.totalorder %s17, 3
      %p132 = por %p130, %p131
      %p133 = scmp.ne.s32.totalorder %s122, %s123
      %p134 = scmp.eq.s32.totalorder %s17, 0
      %p135 = por %p133, %p134
      %p136 = scmp.ne.s32.totalorder %s122, %s123
      %p137 = scmp.eq.s32.totalorder %s18, 3
      %p138 = por %p136, %p137
      %p140 = scmp.ne.s32.totalorder %s123, %s139
      %p141 = scmp.eq.s32.totalorder %s18, 0
      %p142 = por %p140, %p141
      %p143 = scmp.le.s32.totalorder 1, %s12
      %p144 = scmp.lt.s32.totalorder %s12, 5
      %p145 = pnand %p143, %p144
      %p146 = pneg %p145
      // Predicated region
      $region9: #{tpu_custom_call.1} parent=5 // pred_check
        _
      $region10: #{tpu_custom_call.1} parent=5 // pred_check_branch
        %148 = sbr.rel (%p145) target = $region12
      $region11: #{tpu_custom_call.1} parent=5 // pred_region
        %s149 = ssub.s32 %s12, 1
        // Predicated region
        $region13: #{tpu_custom_call.1} parent=11 // pred_check
          %p150 = pneg %p59
        $region14: #{tpu_custom_call.1} parent=11 // pred_check_branch
          %152 = sbr.rel (%p150) target = $region16
        $region15: #{tpu_custom_call.1} parent=11 // pred_region
          _
        $region16: #{tpu_custom_call.1} parent=11 // pred_fallthru
          _
      $region12: #{tpu_custom_call.1} parent=5 // pred_fallthru
        _
      %p153 = scmp.lt.s32.totalorder %s12, 4
      // Predicated region
      $region17: #{tpu_custom_call.1} parent=5 // pred_check
        %p154 = pneg %p153
      $region18: #{tpu_custom_call.1} parent=5 // pred_check_branch
        %156 = sbr.rel (%p154) target = $region20
      $region19: #{tpu_custom_call.1} parent=5 // pred_region
        // Predicated region
        $region21: #{tpu_custom_call.1} parent=19 // pred_check
          %p157 = pneg %p32
        $region22: #{tpu_custom_call.1} parent=19 // pred_check_branch
          %159 = sbr.rel (%p157) target = $region24
        $region23: #{tpu_custom_call.1} parent=19 // pred_region
          %p160 = scmp.lt.s32.totalorder %s12, 3
          %s161 = scalar_select %p160, %s12, 3
          %s162 = smul.addr %s161, 8
          %s163 = scalar_lea.vmem %s0, %s162
        $region24: #{tpu_custom_call.1} parent=19 // pred_fallthru
          _
        // Predicated region
        $region25: #{tpu_custom_call.1} parent=19 // pred_check
          %p164 = pneg %p103
        $region26: #{tpu_custom_call.1} parent=19 // pred_check_branch
          %166 = sbr.rel (%p164) target = $region28
        $region27: #{tpu_custom_call.1} parent=19 // pred_region
          %p167 = scmp.lt.s32.totalorder %s12, 0
          %s168 = ssub.s32 0, %s12
          %s169 = scalar_select %p167, %s168, %s12
          %s170 = sand.u32 %s169, 1
          %s171 = ssub.s32 0, %s170
          %s172 = scalar_select %p167, %s171, %s170
          %p173 = scmp.ne.s32.totalorder %s172, 0
          %p174 = scmp.lt.s32.totalorder %s172, 0
          %p175 = pnand %p174, %p173
          %p176 = pneg %p175
          %s177 = sadd.s32 %s172, 2
          %s178 = scalar_select %p176, %s177, %s172
          %p179 = scmp.lt.s32.totalorder %s178, 1
          %s180 = scalar_select %p179, %s178, 1
          %s181 = smul.addr %s180, 8
          %s182 = scalar_lea.vmem %s2, %s181
          %p183 = scmp.lt.s32.totalorder %s12, 0
          %s184 = ssub.s32 0, %s12
          %s185 = scalar_select %p183, %s184, %s12
          %s186 = sand.u32 %s185, 1
          %s187 = ssub.s32 0, %s186
          %s188 = scalar_select %p183, %s187, %s186
          %p189 = scmp.ne.s32.totalorder %s188, 0
          %p190 = scmp.lt.s32.totalorder %s188, 0
          %p191 = pnand %p190, %p189
          %p192 = pneg %p191
          %s193 = sadd.s32 %s188, 2
          %s194 = scalar_select %p192, %s193, %s188
        $region28: #{tpu_custom_call.1} parent=19 // pred_fallthru
          _
      $region20: #{tpu_custom_call.1} parent=5 // pred_fallthru
        _
      %p195 = scmp.le.s32.totalorder 1, %s12
      %p196 = scmp.lt.s32.totalorder %s12, 5
      %p197 = pnand %p195, %p196
      %p198 = pneg %p197
      // Predicated region
      $region29: #{tpu_custom_call.1} parent=5 // pred_check
        _
      $region30: #{tpu_custom_call.1} parent=5 // pred_check_branch
        %200 = sbr.rel (%p197) target = $region32
      $region31: #{tpu_custom_call.1} parent=5 // pred_region
        %s201 = ssub.s32 %s12, 1
        %p202 = scmp.lt.s32.totalorder %s17, 3
        %s203 = scalar_select %p202, %s17, 3
        %s204 = smul.addr %s203, 8
        %s205 = scalar_lea.vmem %s0, %s204
        %p206 = pneg %p38
        %p207 = pneg %p35
        %p208 = pneg %p59
        %p209 = pneg %p56
        %p210 = scmp.lt.s32.totalorder %s17, 0
        %s211 = ssub.s32 0, %s17
        %s212 = scalar_select %p210, %s211, %s17
        %s213 = sand.u32 %s212, 1
        %s214 = ssub.s32 0, %s213
        %s215 = scalar_select %p210, %s214, %s213
        %p216 = scmp.ne.s32.totalorder %s215, 0
        %p217 = scmp.lt.s32.totalorder %s215, 0
        %p218 = pnand %p217, %p216
        %p219 = pneg %p218
        %s220 = sadd.s32 %s215, 2
        %s221 = scalar_select %p219, %s220, %s215
        %p222 = scmp.lt.s32.totalorder %s221, 1
        %s223 = scalar_select %p222, %s221, 1
        %s224 = smul.addr %s223, 8
        %s225 = scalar_lea.vmem %s2, %s224
        %p226 = pneg %p109
        %p227 = pneg %p106
        %p228 = pneg %p135
        %p229 = pneg %p132
        %s230 = sand.u32 %s122, 1
        %s231 = scalar_lea.sflag [#allocation3], %s230
        %s232 = sand.u32 %s122, 1
        %s233 = smul.addr %s232, 8
        %s234 = scalar_lea.vmem [#allocation2], %s233
        %p235 = scmp.lt.s32.totalorder %s17, 3
        %s236 = scalar_select %p235, %s17, 3
        %s237 = smul.addr %s236, 8
        %s238 = scalar_lea.vmem %s0, %s237
        %p239 = scmp.lt.s32.totalorder %s17, 0
        %s240 = ssub.s32 0, %s17
        %s241 = scalar_select %p239, %s240, %s17
        %s242 = sand.u32 %s241, 1
        %s243 = ssub.s32 0, %s242
        %s244 = scalar_select %p239, %s243, %s242
        %p245 = scmp.ne.s32.totalorder %s244, 0
        %p246 = scmp.lt.s32.totalorder %s244, 0
        %p247 = pnand %p246, %p245
        %p248 = pneg %p247
        %s249 = sadd.s32 %s244, 2
        %s250 = scalar_select %p248, %s249, %s244
        %p251 = scmp.lt.s32.totalorder %s250, 1
        %s252 = scalar_select %p251, %s250, 1
        %s253 = smul.addr %s252, 8
        %s254 = scalar_lea.vmem %s2, %s253
        %p255 = scmp.lt.s32.totalorder %s17, 0
        %s256 = ssub.s32 0, %s17
        %s257 = scalar_select %p255, %s256, %s17
        %s258 = sand.u32 %s257, 1
        %s259 = ssub.s32 0, %s258
        %s260 = scalar_select %p255, %s259, %s258
        %p261 = scmp.ne.s32.totalorder %s260, 0
        %p262 = scmp.lt.s32.totalorder %s260, 0
        %p263 = pnand %p262, %p261
        %p264 = pneg %p263
        %s265 = sadd.s32 %s260, 2
        %s266 = scalar_select %p264, %s265, %s260
        %v267 = vld [vmem:[%s238] sm:$0xff]
        %v268 = vld [vmem:[%s1] sm:$0xff]
        %v269 = vld [vmem:[%s254] sm:$0xff]
        %271 = vset.pattern.permute.xlu0 0
        %272 = vperm.xlu0 %271, %v267
        %v273 = vpop.permute.xlu0 %272
        %v275 = vlaneseq
        %v276 = vshrl.u32 %v275, 7
        %v277 = vsub.s32 0, %v276
        %v278 = vrot.slane %v268, %v277
        %v279 = vmul.f32 %v273, %v278
        %v280 = vadd.f32 %v269, %v279
        %281 = vset.pattern.permute.xlu0 1
        %282 = vperm.xlu0 %281, %v267
        %v283 = vpop.permute.xlu0 %282
        %v285 = vlaneseq
        %v286 = vshrl.u32 %v285, 7
        %v287 = vsub.s32 1, %v286
        %v288 = vrot.slane %v268, %v287
        %v289 = vmul.f32 %v283, %v288
        %v290 = vadd.f32 %v280, %v289
        %291 = vset.pattern.permute.xlu0 2
        %292 = vperm.xlu0 %291, %v267
        %v293 = vpop.permute.xlu0 %292
        %v295 = vlaneseq
        %v296 = vshrl.u32 %v295, 7
        %v297 = vsub.s32 2, %v296
        %v298 = vrot.slane %v268, %v297
        %v299 = vmul.f32 %v293, %v298
        %v300 = vadd.f32 %v290, %v299
        %301 = vset.pattern.permute.xlu0 3
        %302 = vperm.xlu0 %301, %v267
        %v303 = vpop.permute.xlu0 %302
        %v305 = vlaneseq
        %v306 = vshrl.u32 %v305, 7
        %v307 = vsub.s32 3, %v306
        %v308 = vrot.slane %v268, %v307
        %v309 = vmul.f32 %v303, %v308
        %v310 = vadd.f32 %v300, %v309
        %311 = vset.pattern.permute.xlu0 4
        %312 = vperm.xlu0 %311, %v267
        %v313 = vpop.permute.xlu0 %312
        %v315 = vlaneseq
        %v316 = vshrl.u32 %v315, 7
        %v317 = vsub.s32 4, %v316
        %v318 = vrot.slane %v268, %v317
        %v319 = vmul.f32 %v313, %v318
        %v320 = vadd.f32 %v310, %v319
        %321 = vset.pattern.permute.xlu0 5
        %322 = vperm.xlu0 %321, %v267
        %v323 = vpop.permute.xlu0 %322
        %v325 = vlaneseq
        %v326 = vshrl.u32 %v325, 7
        %v327 = vsub.s32 5, %v326
        %v328 = vrot.slane %v268, %v327
        %v329 = vmul.f32 %v323, %v328
        %v330 = vadd.f32 %v320, %v329
        %331 = vset.pattern.permute.xlu0 6
        %332 = vperm.xlu0 %331, %v267
        %v333 = vpop.permute.xlu0 %332
        %v335 = vlaneseq
        %v336 = vshrl.u32 %v335, 7
        %v337 = vsub.s32 6, %v336
        %v338 = vrot.slane %v268, %v337
        %v339 = vmul.f32 %v333, %v338
        %v340 = vadd.f32 %v330, %v339
        %341 = vset.pattern.permute.xlu0 7
        %342 = vperm.xlu0 %341, %v267
        %v343 = vpop.permute.xlu0 %342
        %v345 = vlaneseq
        %v346 = vshrl.u32 %v345, 7
        %v347 = vsub.s32 7, %v346
        %v348 = vrot.slane %v268, %v347
        %v349 = vmul.f32 %v343, %v348
        %v350 = vadd.f32 %v340, %v349
        %vm351 = vcmask 261120
        %352 = vst.msk [vmem:[%s234] sm:$0xff] %vm351, %v350
        %s353 = sand.u32 %s122, 1
        %s354 = scalar_lea.sflag [#allocation3], %s353
        %s355 = sand.u32 %s122, 1
        %s356 = smul.addr %s355, 8
        %s357 = scalar_lea.vmem [#allocation2], %s356
        // Predicated region
        $region33: #{tpu_custom_call.1} parent=31 // pred_check
          %p358 = pneg %p132
        $region34: #{tpu_custom_call.1} parent=31 // pred_check_branch
          %360 = sbr.rel (%p358) target = $region36
        $region35: #{tpu_custom_call.1} parent=31 // pred_region
          %s362 = ssub.s32 128, 128
          %363 = vsyncadd %s354, %s362
          %s364 = smul.addr %s17, 128
          %s365 = scalar_lea.hbm %s3, %s364
          %s367 = sshll.u32 %s357, 4
          %s368 = int_to_ptr.vmem [resolvable:$true] %s367
          %370 = dma.vmem_to_hbm [thread:$0]  %s368, 128, %s365, %s354
        $region36: #{tpu_custom_call.1} parent=31 // pred_fallthru
          _
      $region32: #{tpu_custom_call.1} parent=5 // pred_fallthru
        _
      %p371 = scmp.le.s32.totalorder 2, %s12
      // Predicated region
      $region37: #{tpu_custom_call.1} parent=5 // pred_check
        %p372 = pneg %p371
      $region38: #{tpu_custom_call.1} parent=5 // pred_check_branch
        %374 = sbr.rel (%p372) target = $region40
      $region39: #{tpu_custom_call.1} parent=5 // pred_region
        %s375 = ssub.s32 %s12, 2
        // Predicated region
        $region41: #{tpu_custom_call.1} parent=39 // pred_check
          %p376 = pneg %p138
        $region42: #{tpu_custom_call.1} parent=39 // pred_check_branch
          %378 = sbr.rel (%p376) target = $region44
        $region43: #{tpu_custom_call.1} parent=39 // pred_region
          %s379 = sand.u32 %s123, 1
          %s380 = scalar_lea.sflag [#allocation3], %s379
          %s381 = sand.u32 %s123, 1
          %s382 = smul.addr %s381, 8
          %s383 = scalar_lea.vmem [#allocation2], %s382
          %384 = dma.done %s380, 128
        $region44: #{tpu_custom_call.1} parent=39 // pred_fallthru
          _
      $region40: #{tpu_custom_call.1} parent=5 // pred_fallthru
        _
    $region6: #{tpu_custom_call.1} parent=1 // loop_footer
      %s16 = sadd.s32 1, %s12
    $region7: #{tpu_custom_call.1} parent=1 // loop_footer_branch
      %11 = sbr.rel target = $region3
    $region8: #{tpu_custom_call.1} parent=1 // loop_exit
      _
    %385 = vsyncpa [#allocation3], 1
    %s386 = scalar_lea.sflag [#allocation3], 1
    %387 = vsyncpa %s386, 1

</llo_original>
